<compile_context>
chip_gen: v7x
topology: tpu7x:2x2x1
jax: 0.10.0
libtpu: 0.0.40
codegen_flags: <defaults>
</compile_context>

<pallas_src>
import math
from functools import partial

import jax
import jax.numpy as jnp
from jax.experimental import pallas as pl
from jax.experimental.pallas import tpu as pltpu


# Row layout of the packed per-layer "vecs" slab (8 rows x VW lanes).
_ROW_BQKV = 0   # [bq | bk | bv]        width 3*H*A
_ROW_BP   = 1   # attention proj bias   width D
_ROW_LN1G = 2   # LayerNorm-1 gamma     width D
_ROW_LN1B = 3   # LayerNorm-1 beta      width D
_ROW_B1   = 4   # FFN hidden bias       width F
_ROW_B2   = 5   # FFN output bias       width D
_ROW_LN2G = 6   # LayerNorm-2 gamma     width D
_ROW_LN2B = 7   # LayerNorm-2 beta      width D
_N_VEC_ROWS = 8


# --------------------------------------------------------------------------
# Fused encoder-stack kernel: one batch tile x all layers
# --------------------------------------------------------------------------
def _make_fused_kernel(bt, S, D, H, A, F):
    """bt: batch tile; S: seq len; D: model dim; H: heads; A: head features; F: FFN dim."""
    BS = bt * S
    HA = H * A
    QKV = 3 * HA
    inv_norm = 1.0 / math.sqrt(A)
    eps = 1e-5

    def layer_norm(x, g, b):
        mu = jnp.mean(x, axis=-1, keepdims=True)
        var = jnp.mean((x - mu) ** 2, axis=-1, keepdims=True)
        return (x - mu) * jax.lax.rsqrt(var + eps) * g + b

    def gather_heads(t, base):
        # t: (bt, S, 3*H*A) -> (H*bt, S, A); heads moved to a leading batch axis so the
        # score/PV contractions are single batched einsums (index = h*bt + b).
        return jnp.concatenate(
            [t[:, :, base + h * A: base + (h + 1) * A] for h in range(H)], axis=0)

    def merge_heads(t):
        # (H*bt, S, A) -> (bt, S, H*A); lane order head-major (matches Wp's row order).
        t4 = t.reshape(H, bt, S, A)
        return jnp.concatenate([t4[h] for h in range(H)], axis=-1)

    def kernel(x_ref, w_in_ref, w_out_ref, vec_ref, o_ref):
        # Seed the resident activation with the embeddings at layer 0.  (The HBM buffer
        # is aliased input->output, but the VMEM output block is not pre-loaded, so this
        # single copy per batch tile stays for correctness.)
        @pl.when(pl.program_id(1) == 0)
        def _():
            o_ref[...] = x_ref[...]

        w_dtype = w_in_ref.dtype                 # f32, or bf16 in streamed-weight mode
        x = o_ref[...].reshape(BS, D).astype(jnp.float32)

        # Packed per-layer parameters (one DMA each for w_in / w_out / vecs).
        w_in = w_in_ref[0]                       # (D, 3*H*A + F)
        w_out = w_out_ref[0]                     # (H*A + F, D)
        vec = vec_ref[0].astype(jnp.float32)     # (8, VW)
        b_qkv = vec[_ROW_BQKV:_ROW_BQKV + 1, :QKV]
        b_p   = vec[_ROW_BP:_ROW_BP + 1, :D]
        ln1g  = vec[_ROW_LN1G:_ROW_LN1G + 1, :D]
        ln1b  = vec[_ROW_LN1B:_ROW_LN1B + 1, :D]
        b_1   = vec[_ROW_B1:_ROW_B1 + 1, :F]
        b_2   = vec[_ROW_B2:_ROW_B2 + 1, :D]
        ln2g  = vec[_ROW_LN2G:_ROW_LN2G + 1, :D]
        ln2b  = vec[_ROW_LN2B:_ROW_LN2B + 1, :D]

        # ---- multi-head attention ----
        # Fused Q/K/V: one (BS, D) x (D, 3*H*A) MXU push for all heads.
        qkv = jnp.dot(x.astype(w_dtype), w_in[:, :QKV],
                      preferred_element_type=jnp.float32) + b_qkv       # (BS, 3*H*A)
        qkv3 = qkv.reshape(bt, S, QKV)
        q = gather_heads(qkv3, 0)                                        # (H*bt, S, A)
        k = gather_heads(qkv3, HA)
        v = gather_heads(qkv3, 2 * HA)

        # All heads in ONE batched einsum each.  Contraction is on the trailing dim of
        # both operands -> dot_general's trans_b path (no extra transpose of k).
        s = jnp.einsum('bqa,bka->bqk', q, k,
                       preferred_element_type=jnp.float32) * inv_norm    # (H*bt, S, S)
        s = s - jnp.max(s, axis=-1, keepdims=True)
        p = jnp.exp(s)
        p = p * pl.reciprocal(jnp.sum(p, axis=-1, keepdims=True), approx=True)
        o = jnp.einsum('bqk,bka->bqa', p, v,
                       preferred_element_type=jnp.float32)               # (H*bt, S, A)

        # Single output projection for all heads: (BS, H*A) x (H*A, D).
        heads = merge_heads(o).reshape(BS, HA)
        attn = jnp.dot(heads.astype(w_dtype), w_out[:HA, :],
                       preferred_element_type=jnp.float32) + b_p

        # residual + LayerNorm 1 (f32 elementwise; v5e has no bf16 VPU/EUP path)
        x = layer_norm(x + attn, ln1g, ln1b)

        # ---- FFN: Linear -> ReLU -> Linear ----
        h1 = jnp.dot(x.astype(w_dtype), w_in[:, QKV:],
                     preferred_element_type=jnp.float32) + b_1
        h1 = jnp.maximum(h1, 0.0)
        ffn = jnp.dot(h1.astype(w_dtype), w_out[HA:, :],
                      preferred_element_type=jnp.float32) + b_2

        # residual + LayerNorm 2
        x = layer_norm(x + ffn, ln2g, ln2b)

        o_ref[...] = x.reshape(bt, S, D).astype(o_ref.dtype)

    return kernel


def transformer_encoder_stack(x, w_in, w_out, vecs, num_heads, *,
                              batch_tile=None, vmem_limit_bytes=None):
    """x: (B, S, D) f32 embeddings; w_in/w_out/vecs: (L, ...) packed per-layer slabs."""
    B, S, D = x.shape
    L, _, c_in = w_in.shape                  # c_in  = 3*H*A + F
    c_out = w_out.shape[1]                   # c_out = H*A + F
    HA = (c_in - c_out) // 2
    F = c_out - HA
    A = HA // num_heads
    VW = vecs.shape[2]

    # Batch tiling: nb = B // bt steps on the "parallel" grid axis.
    #   * v5e / v6e (1 TensorCore): keep bt = B (weights stream from HBM exactly once).
    #   * v7x (2 TensorCores): pass batch_tile = B // 2 so both cores get work.
    bt = B if batch_tile is None else min(batch_tile, B)
    assert B % bt == 0, "batch must be divisible by batch_tile"
    nb = B // bt

    kernel = _make_fused_kernel(bt, S, D, num_heads, A, F)

    in_specs = [
        pl.BlockSpec((bt, S, D), lambda b, l: (b, 0, 0)),            # activation (resident)
        pl.BlockSpec((1, D, c_in), lambda b, l: (l, 0, 0)),          # [Wq|Wk|Wv|W1]
        pl.BlockSpec((1, c_out, D), lambda b, l: (l, 0, 0)),         # [Wp;W2]
        pl.BlockSpec((1, _N_VEC_ROWS, VW), lambda b, l: (l, 0, 0)),  # biases + LN params
    ]
    out_spec = pl.BlockSpec((bt, S, D), lambda b, l: (b, 0, 0))      # constant over l -> resident

    cp = dict(dimension_semantics=("parallel", "arbitrary"))
    if vmem_limit_bytes is not None:
        # Needed when scaling D/F: full (D,F)/(F,D) weight blocks exceed the scoped VMEM
        # default long before physical VMEM (on v7x also tile F / stream bf16 weights).
        cp["vmem_limit_bytes"] = vmem_limit_bytes

    return pl.pallas_call(
        kernel,
        out_shape=jax.ShapeDtypeStruct((B, S, D), x.dtype),
        grid_spec=pltpu.PrefetchScalarGridSpec(
            num_scalar_prefetch=0,
            grid=(nb, L),
            in_specs=in_specs,
            out_specs=out_spec,
        ),
        input_output_aliases={0: 0},   # donate the embeddings HBM buffer to the output
        compiler_params=pltpu.CompilerParams(**cp),
    )(x, w_in, w_out, vecs)


# --------------------------------------------------------------------------
# Parameter construction (deterministic, mirrors PyTorch __init__ shapes)
# --------------------------------------------------------------------------
def linear_init(key, fan_in, fan_out):
    # PyTorch nn.Linear default: U(-1/sqrt(fan_in), 1/sqrt(fan_in)); store W as (in, out).
    k1, k2 = jax.random.split(key)
    bound = 1.0 / math.sqrt(fan_in)
    w = jax.random.uniform(k1, (fan_in, fan_out), jnp.float32, -bound, bound)
    b = jax.random.uniform(k2, (fan_out,), jnp.float32, -bound, bound)
    return w, b


def make_block_params(key, dim, attn_features, num_heads, ffn_features):
    """One encoder block's parameters, packed into (w_in, w_out, vecs) slabs."""
    D, A, H, F = dim, attn_features, num_heads, ffn_features
    HA = H * A
    keys = jax.random.split(key, 3 * H + 3)

    wq, bq, wk, bk, wv, bv = [], [], [], [], [], []
    for h in range(H):
        w, b = linear_init(keys[3 * h + 0], D, A); wq.append(w); bq.append(b)
        w, b = linear_init(keys[3 * h + 1], D, A); wk.append(w); bk.append(b)
        w, b = linear_init(keys[3 * h + 2], D, A); wv.append(w); bv.append(b)
    # Heads stacked along the output-feature axis (head h -> columns [h*A, (h+1)*A)),
    # matching torch.cat over heads / the proj layer's input ordering.
    wq = jnp.concatenate(wq, axis=1); bq = jnp.concatenate(bq)
    wk = jnp.concatenate(wk, axis=1); bk = jnp.concatenate(bk)
    wv = jnp.concatenate(wv, axis=1); bv = jnp.concatenate(bv)

    wp, bp = linear_init(keys[3 * H + 0], HA, D)
    w1, b1 = linear_init(keys[3 * H + 1], D, F)
    w2, b2 = linear_init(keys[3 * H + 2], F, D)
    ln1g = jnp.ones((D,), jnp.float32); ln1b = jnp.zeros((D,), jnp.float32)
    ln2g = jnp.ones((D,), jnp.float32); ln2b = jnp.zeros((D,), jnp.float32)

    # Packed slabs (see kernel header): 3 streamed DMAs per layer instead of 16.
    w_in = jnp.concatenate([wq, wk, wv, w1], axis=1)        # (D, 3*H*A + F)
    w_out = jnp.concatenate([wp, w2], axis=0)               # (H*A + F, D)
    vw = max(3 * HA, F, D)
    pad = lambda v: jnp.pad(v, (0, vw - v.shape[0]))
    vecs = jnp.stack(
        [pad(jnp.concatenate([bq, bk, bv])),                # _ROW_BQKV
         pad(bp), pad(ln1g), pad(ln1b),                     # _ROW_BP/_ROW_LN1G/_ROW_LN1B
         pad(b1), pad(b2), pad(ln2g), pad(ln2b)],           # _ROW_B1/_ROW_B2/_ROW_LN2G/_ROW_LN2B
        axis=0)                                             # (8, VW)
    return w_in, w_out, vecs


def stack_layer_params(per_layer):
    """Per-layer (w_in, w_out, vecs) -> stacked (L, ...) slabs streamed by the kernel."""
    return tuple(jnp.stack(ps, axis=0) for ps in zip(*per_layer))


def cast_weight_slabs(w_in, w_out, vecs, dtype=jnp.bfloat16):
    """Optional bf16 weight streaming (v6e/v7x): halves weight HBM traffic and the
    double-buffered weight VMEM; matmuls keep f32 accumulation, elementwise stays f32."""
    return w_in.astype(dtype), w_out.astype(dtype), vecs.astype(dtype)


def make_embeddings(key, vocab_size, num_pos, dim):
    k1, k2 = jax.random.split(key)
    tok = jax.random.normal(k1, (vocab_size, dim), jnp.float32)
    pos = jax.random.normal(k2, (num_pos, dim), jnp.float32)
    # padding_idx=0 -> zero row, matching nn.Embedding(padding_idx=0)
    return tok.at[0].set(0.0), pos.at[0].set(0.0)


@partial(jax.jit, static_argnames=("num_heads", "batch_tile"))
def transformer_encoder(ids, pos, tok_emb, pos_emb, w_in, w_out, vecs, *,
                        num_heads, batch_tile=None):
    # Embeddings (gather glue) + dropout (inference-mode identity).
    # TODO(synk): train-mode stochastic dropout is not reproduced (eval semantics used).
    x = jnp.take(tok_emb, ids, axis=0) + jnp.take(pos_emb, pos, axis=0)   # (B, S, D)
    return transformer_encoder_stack(x, w_in, w_out, vecs, num_heads,
                                     batch_tile=batch_tile)


# --------------------------------------------------------------------------
if __name__ == "__main__":
    # Small, forward-consistent config.
    vocab_size = 50
    num_pos = 16
    num_layers = 2
    dim = 32
    attn_features = 8
    attn_num_heads = 4
    ffn_features = 64
    B, S = 2, 8

    root = jax.random.PRNGKey(0)
    k_emb, k_blocks, k_ids = jax.random.split(root, 3)

    tok_emb, pos_emb = make_embeddings(k_emb, vocab_size, num_pos, dim)
    block_keys = jax.random.split(k_blocks, num_layers)
    per_layer = [make_block_params(bk, dim, attn_features, attn_num_heads, ffn_features)
                 for bk in block_keys]
    w_in, w_out, vecs = stack_layer_params(per_layer)
    # Optional on v6e/v7x (halves streamed-weight HBM/VMEM; f32 math unchanged):
    # w_in, w_out, vecs = cast_weight_slabs(w_in, w_out, vecs, jnp.bfloat16)

    ids = jax.random.randint(k_ids, (B, S), 0, vocab_size, dtype=jnp.int32)
    pos = jnp.broadcast_to(jnp.arange(S, dtype=jnp.int32), (B, S))

    out = transformer_encoder(ids, pos, tok_emb, pos_emb, w_in, w_out, vecs,
                              num_heads=attn_num_heads)
    out = jax.block_until_ready(out)
    assert out.shape == (B, S, dim)
    assert bool(jnp.all(jnp.isfinite(out)))
    print("KERNEL_OK")
</pallas_src>

<mosaic_0001>
module attributes {stable_mosaic.version = 11 : i64} {
  func.func @kernel(%arg0: i32, %arg1: i32, %arg2: memref<2x8x32xf32, #tpu.memory_space<vmem>>, %arg3: memref<1x32x160xf32, #tpu.memory_space<vmem>>, %arg4: memref<1x96x32xf32, #tpu.memory_space<vmem>>, %arg5: memref<1x8x96xf32, #tpu.memory_space<vmem>>, %arg6: memref<2x8x32xf32, #tpu.memory_space<vmem>>) attributes {dimension_semantics = [#tpu.dimension_semantics<parallel>, #tpu.dimension_semantics<arbitrary>], iteration_bounds = array<i64: 1, 2>, scalar_prefetch = 0 : i64, scratch_operands = 0 : i64, tpu.core_type = #tpu.core_type<tc>, window_params = [{transform_indices = @transform_0, window_bounds = array<i64: 2, 8, 32>}, {transform_indices = @transform_1, window_bounds = array<i64: 1, 32, 160>}, {transform_indices = @transform_2, window_bounds = array<i64: 1, 96, 32>}, {transform_indices = @transform_3, window_bounds = array<i64: 1, 8, 96>}, {transform_indices = @transform_4, window_bounds = array<i64: 2, 8, 32>}]} {
    %c0_i32 = arith.constant 0 : i32
    %0 = arith.cmpi eq, %arg1, %c0_i32 : i32
    %1 = arith.extui %0 : i1 to i32
    %c0_i32_0 = arith.constant 0 : i32
    %2 = arith.cmpi ne, %1, %c0_i32_0 : i32
    scf.if %2 {
      %c0_34 = arith.constant 0 : index
      %c0_35 = arith.constant 0 : index
      %c0_36 = arith.constant 0 : index
      %126 = vector.load %arg2[%c0_34, %c0_35, %c0_36] : memref<2x8x32xf32, #tpu.memory_space<vmem>>, vector<2x8x32xf32>
      %c0_37 = arith.constant 0 : index
      %c0_38 = arith.constant 0 : index
      %c0_39 = arith.constant 0 : index
      %127 = vector.load %arg6[%c0_37, %c0_38, %c0_39] : memref<2x8x32xf32, #tpu.memory_space<vmem>>, vector<2x8x32xf32>
      tpu.vector_store %arg6[%c0_37, %c0_38, %c0_39], %126 {strides = array<i32>} : memref<2x8x32xf32, #tpu.memory_space<vmem>>, vector<2x8x32xf32>,
    } else {
    }
    %c0 = arith.constant 0 : index
    %c0_1 = arith.constant 0 : index
    %c0_2 = arith.constant 0 : index
    %3 = vector.load %arg6[%c0, %c0_1, %c0_2] : memref<2x8x32xf32, #tpu.memory_space<vmem>>, vector<2x8x32xf32>
    %4 = vector.shape_cast %3 : vector<2x8x32xf32> to vector<16x32xf32>
    %c0_3 = arith.constant 0 : index
    %c0_4 = arith.constant 0 : index
    %c0_5 = arith.constant 0 : index
    %5 = vector.load %arg3[%c0_3, %c0_4, %c0_5] : memref<1x32x160xf32, #tpu.memory_space<vmem>>, vector<1x32x160xf32>
    %6 = vector.shape_cast %5 : vector<1x32x160xf32> to vector<32x160xf32>
    %c0_6 = arith.constant 0 : index
    %c0_7 = arith.constant 0 : index
    %c0_8 = arith.constant 0 : index
    %7 = vector.load %arg4[%c0_6, %c0_7, %c0_8] : memref<1x96x32xf32, #tpu.memory_space<vmem>>, vector<1x96x32xf32>
    %8 = vector.shape_cast %7 : vector<1x96x32xf32> to vector<96x32xf32>
    %c0_9 = arith.constant 0 : index
    %c0_10 = arith.constant 0 : index
    %c0_11 = arith.constant 0 : index
    %9 = vector.load %arg5[%c0_9, %c0_10, %c0_11] : memref<1x8x96xf32, #tpu.memory_space<vmem>>, vector<1x8x96xf32>
    %10 = vector.shape_cast %9 : vector<1x8x96xf32> to vector<8x96xf32>
    %11 = vector.extract_strided_slice %10 {offsets = [0, 0], sizes = [1, 96], strides = [1, 1]} : vector<8x96xf32> to vector<1x96xf32>
    %12 = vector.extract_strided_slice %10 {offsets = [1, 0], sizes = [1, 32], strides = [1, 1]} : vector<8x96xf32> to vector<1x32xf32>
    %13 = vector.extract_strided_slice %10 {offsets = [2, 0], sizes = [1, 32], strides = [1, 1]} : vector<8x96xf32> to vector<1x32xf32>
    %14 = vector.extract_strided_slice %10 {offsets = [3, 0], sizes = [1, 32], strides = [1, 1]} : vector<8x96xf32> to vector<1x32xf32>
    %15 = vector.extract_strided_slice %10 {offsets = [4, 0], sizes = [1, 64], strides = [1, 1]} : vector<8x96xf32> to vector<1x64xf32>
    %16 = vector.extract_strided_slice %10 {offsets = [5, 0], sizes = [1, 32], strides = [1, 1]} : vector<8x96xf32> to vector<1x32xf32>
    %17 = vector.extract_strided_slice %10 {offsets = [6, 0], sizes = [1, 32], strides = [1, 1]} : vector<8x96xf32> to vector<1x32xf32>
    %18 = vector.extract_strided_slice %10 {offsets = [7, 0], sizes = [1, 32], strides = [1, 1]} : vector<8x96xf32> to vector<1x32xf32>
    %19 = vector.extract_strided_slice %6 {offsets = [0, 0], sizes = [32, 96], strides = [1, 1]} : vector<32x160xf32> to vector<32x96xf32>
    %cst = arith.constant dense<0.000000e+00> : vector<16x96xf32>
    %20 = tpu.matmul %4, %19, %cst {dimension_numbers = #tpu.dot_dimension_numbers<[1], [0], [0], [1], [0, 0, 1, 1], [], []>} : vector<16x32xf32>, vector<32x96xf32>, vector<16x96xf32> -> vector<16x96xf32>
    %21 = vector.broadcast %11 : vector<1x96xf32> to vector<16x96xf32>
    %22 = arith.addf %20, %21 : vector<16x96xf32>
    %23 = vector.shape_cast %22 : vector<16x96xf32> to vector<2x8x96xf32>
    %24 = vector.extract_strided_slice %23 {offsets = [0, 0, 0], sizes = [2, 8, 8], strides = [1, 1, 1]} : vector<2x8x96xf32> to vector<2x8x8xf32>
    %25 = vector.extract_strided_slice %23 {offsets = [0, 0, 8], sizes = [2, 8, 8], strides = [1, 1, 1]} : vector<2x8x96xf32> to vector<2x8x8xf32>
    %26 = vector.extract_strided_slice %23 {offsets = [0, 0, 16], sizes = [2, 8, 8], strides = [1, 1, 1]} : vector<2x8x96xf32> to vector<2x8x8xf32>
    %27 = vector.extract_strided_slice %23 {offsets = [0, 0, 24], sizes = [2, 8, 8], strides = [1, 1, 1]} : vector<2x8x96xf32> to vector<2x8x8xf32>
    %28 = tpu.concatenate %24, %25, %26, %27 in 0 : vector<2x8x8xf32>, vector<2x8x8xf32>, vector<2x8x8xf32>, vector<2x8x8xf32> -> vector<8x8x8xf32>
    %29 = vector.extract_strided_slice %23 {offsets = [0, 0, 32], sizes = [2, 8, 8], strides = [1, 1, 1]} : vector<2x8x96xf32> to vector<2x8x8xf32>
    %30 = vector.extract_strided_slice %23 {offsets = [0, 0, 40], sizes = [2, 8, 8], strides = [1, 1, 1]} : vector<2x8x96xf32> to vector<2x8x8xf32>
    %31 = vector.extract_strided_slice %23 {offsets = [0, 0, 48], sizes = [2, 8, 8], strides = [1, 1, 1]} : vector<2x8x96xf32> to vector<2x8x8xf32>
    %32 = vector.extract_strided_slice %23 {offsets = [0, 0, 56], sizes = [2, 8, 8], strides = [1, 1, 1]} : vector<2x8x96xf32> to vector<2x8x8xf32>
    %33 = tpu.concatenate %29, %30, %31, %32 in 0 : vector<2x8x8xf32>, vector<2x8x8xf32>, vector<2x8x8xf32>, vector<2x8x8xf32> -> vector<8x8x8xf32>
    %34 = vector.extract_strided_slice %23 {offsets = [0, 0, 64], sizes = [2, 8, 8], strides = [1, 1, 1]} : vector<2x8x96xf32> to vector<2x8x8xf32>
    %35 = vector.extract_strided_slice %23 {offsets = [0, 0, 72], sizes = [2, 8, 8], strides = [1, 1, 1]} : vector<2x8x96xf32> to vector<2x8x8xf32>
    %36 = vector.extract_strided_slice %23 {offsets = [0, 0, 80], sizes = [2, 8, 8], strides = [1, 1, 1]} : vector<2x8x96xf32> to vector<2x8x8xf32>
    %37 = vector.extract_strided_slice %23 {offsets = [0, 0, 88], sizes = [2, 8, 8], strides = [1, 1, 1]} : vector<2x8x96xf32> to vector<2x8x8xf32>
    %38 = tpu.concatenate %34, %35, %36, %37 in 0 : vector<2x8x8xf32>, vector<2x8x8xf32>, vector<2x8x8xf32>, vector<2x8x8xf32> -> vector<8x8x8xf32>
    "tpu.trace_start"() <{level = 10 : i32, message = "bqa,bka->bqk"}> : () -> ()
    %cst_12 = arith.constant dense<0.000000e+00> : vector<8x8x8xf32>
    %39 = tpu.matmul %28, %33, %cst_12 {dimension_numbers = #tpu.dot_dimension_numbers<[2], [2], [1], [1], [0, 0, 0, 1, 1, 1], [0], [0]>} : vector<8x8x8xf32>, vector<8x8x8xf32>, vector<8x8x8xf32> -> vector<8x8x8xf32>
    "tpu.trace_stop"() : () -> ()
    %cst_13 = arith.constant 0.353553385 : f32
    %40 = vector.broadcast %cst_13 : f32 to vector<8x8x8xf32>
    %41 = arith.mulf %39, %40 : vector<8x8x8xf32>
    %cst_14 = arith.constant dense<0xFF800000> : vector<8x8xf32>
    %42 = vector.multi_reduction <maximumf>, %41, %cst_14 [2] : vector<8x8x8xf32> to vector<8x8xf32>
    %43 = vector.shape_cast %42 : vector<8x8xf32> to vector<8x8x1xf32>
    %44 = vector.broadcast %43 : vector<8x8x1xf32> to vector<8x8x8xf32>
    %45 = arith.subf %41, %44 : vector<8x8x8xf32>
    %46 = math.exp %45 : vector<8x8x8xf32>
    %cst_15 = arith.constant dense<0.000000e+00> : vector<8x8xf32>
    %47 = vector.multi_reduction <add>, %46, %cst_15 [2] : vector<8x8x8xf32> to vector<8x8xf32>
    %48 = vector.shape_cast %47 : vector<8x8xf32> to vector<8x8x1xf32>
    %49 = tpu.reciprocal %48 {approx = true} : vector<8x8x1xf32> -> vector<8x8x1xf32>
    %50 = vector.broadcast %49 : vector<8x8x1xf32> to vector<8x8x8xf32>
    %51 = arith.mulf %46, %50 : vector<8x8x8xf32>
    "tpu.trace_start"() <{level = 10 : i32, message = "bqk,bka->bqa"}> : () -> ()
    %cst_16 = arith.constant dense<0.000000e+00> : vector<8x8x8xf32>
    %52 = tpu.matmul %51, %38, %cst_16 {dimension_numbers = #tpu.dot_dimension_numbers<[2], [1], [1], [2], [0, 0, 0, 1, 1, 2], [0], [0]>} : vector<8x8x8xf32>, vector<8x8x8xf32>, vector<8x8x8xf32> -> vector<8x8x8xf32>
    "tpu.trace_stop"() : () -> ()
    %53 = vector.shape_cast %52 : vector<8x8x8xf32> to vector<4x2x8x8xf32>
    %54 = vector.extract_strided_slice %53 {offsets = [0, 0, 0, 0], sizes = [1, 2, 8, 8], strides = [1, 1, 1, 1]} : vector<4x2x8x8xf32> to vector<1x2x8x8xf32>
    %55 = vector.shape_cast %54 : vector<1x2x8x8xf32> to vector<2x8x8xf32>
    %56 = vector.extract_strided_slice %53 {offsets = [1, 0, 0, 0], sizes = [1, 2, 8, 8], strides = [1, 1, 1, 1]} : vector<4x2x8x8xf32> to vector<1x2x8x8xf32>
    %57 = vector.shape_cast %56 : vector<1x2x8x8xf32> to vector<2x8x8xf32>
    %58 = vector.extract_strided_slice %53 {offsets = [2, 0, 0, 0], sizes = [1, 2, 8, 8], strides = [1, 1, 1, 1]} : vector<4x2x8x8xf32> to vector<1x2x8x8xf32>
    %59 = vector.shape_cast %58 : vector<1x2x8x8xf32> to vector<2x8x8xf32>
    %60 = vector.extract_strided_slice %53 {offsets = [3, 0, 0, 0], sizes = [1, 2, 8, 8], strides = [1, 1, 1, 1]} : vector<4x2x8x8xf32> to vector<1x2x8x8xf32>
    %61 = vector.shape_cast %60 : vector<1x2x8x8xf32> to vector<2x8x8xf32>
    %62 = tpu.concatenate %55, %57, %59, %61 in 2 : vector<2x8x8xf32>, vector<2x8x8xf32>, vector<2x8x8xf32>, vector<2x8x8xf32> -> vector<2x8x32xf32>
    %63 = vector.shape_cast %62 : vector<2x8x32xf32> to vector<16x32xf32>
    %64 = vector.extract_strided_slice %8 {offsets = [0, 0], sizes = [32, 32], strides = [1, 1]} : vector<96x32xf32> to vector<32x32xf32>
    %cst_17 = arith.constant dense<0.000000e+00> : vector<16x32xf32>
    %65 = tpu.matmul %63, %64, %cst_17 {dimension_numbers = #tpu.dot_dimension_numbers<[1], [0], [0], [1], [0, 0, 1, 1], [], []>} : vector<16x32xf32>, vector<32x32xf32>, vector<16x32xf32> -> vector<16x32xf32>
    %66 = vector.broadcast %12 : vector<1x32xf32> to vector<16x32xf32>
    %67 = arith.addf %65, %66 : vector<16x32xf32>
    %68 = arith.addf %4, %67 : vector<16x32xf32>
    %cst_18 = arith.constant dense<0.000000e+00> : vector<16xf32>
    %69 = vector.multi_reduction <add>, %68, %cst_18 [1] : vector<16x32xf32> to vector<16xf32>
    %70 = vector.shape_cast %69 : vector<16xf32> to vector<16x1xf32>
    %cst_19 = arith.constant 3.200000e+01 : f32
    %71 = vector.broadcast %cst_19 : f32 to vector<16x1xf32>
    %72 = arith.divf %70, %71 : vector<16x1xf32>
    %73 = vector.broadcast %72 : vector<16x1xf32> to vector<16x32xf32>
    %74 = arith.subf %68, %73 : vector<16x32xf32>
    %75 = arith.mulf %74, %74 : vector<16x32xf32>
    %cst_20 = arith.constant dense<0.000000e+00> : vector<16xf32>
    %76 = vector.multi_reduction <add>, %75, %cst_20 [1] : vector<16x32xf32> to vector<16xf32>
    %77 = vector.shape_cast %76 : vector<16xf32> to vector<16x1xf32>
    %cst_21 = arith.constant 3.200000e+01 : f32
    %78 = vector.broadcast %cst_21 : f32 to vector<16x1xf32>
    %79 = arith.divf %77, %78 : vector<16x1xf32>
    %80 = vector.broadcast %72 : vector<16x1xf32> to vector<16x32xf32>
    %81 = arith.subf %68, %80 : vector<16x32xf32>
    %cst_22 = arith.constant 9.99999974E-6 : f32
    %82 = vector.broadcast %cst_22 : f32 to vector<16x1xf32>
    %83 = arith.addf %79, %82 : vector<16x1xf32>
    %84 = math.rsqrt %83 : vector<16x1xf32>
    %85 = vector.broadcast %84 : vector<16x1xf32> to vector<16x32xf32>
    %86 = arith.mulf %81, %85 : vector<16x32xf32>
    %87 = vector.broadcast %13 : vector<1x32xf32> to vector<16x32xf32>
    %88 = arith.mulf %86, %87 : vector<16x32xf32>
    %89 = vector.broadcast %14 : vector<1x32xf32> to vector<16x32xf32>
    %90 = arith.addf %88, %89 : vector<16x32xf32>
    %91 = vector.extract_strided_slice %6 {offsets = [0, 96], sizes = [32, 64], strides = [1, 1]} : vector<32x160xf32> to vector<32x64xf32>
    %cst_23 = arith.constant dense<0.000000e+00> : vector<16x64xf32>
    %92 = tpu.matmul %90, %91, %cst_23 {dimension_numbers = #tpu.dot_dimension_numbers<[1], [0], [0], [1], [0, 0, 1, 1], [], []>} : vector<16x32xf32>, vector<32x64xf32>, vector<16x64xf32> -> vector<16x64xf32>
    %93 = vector.broadcast %15 : vector<1x64xf32> to vector<16x64xf32>
    %94 = arith.addf %92, %93 : vector<16x64xf32>
    %cst_24 = arith.constant 0.000000e+00 : f32
    %95 = vector.broadcast %cst_24 : f32 to vector<16x64xf32>
    %96 = arith.maximumf %94, %95 : vector<16x64xf32>
    %97 = vector.extract_strided_slice %8 {offsets = [32, 0], sizes = [64, 32], strides = [1, 1]} : vector<96x32xf32> to vector<64x32xf32>
    %cst_25 = arith.constant dense<0.000000e+00> : vector<16x32xf32>
    %98 = tpu.matmul %96, %97, %cst_25 {dimension_numbers = #tpu.dot_dimension_numbers<[1], [0], [0], [1], [0, 0, 1, 1], [], []>} : vector<16x64xf32>, vector<64x32xf32>, vector<16x32xf32> -> vector<16x32xf32>
    %99 = vector.broadcast %16 : vector<1x32xf32> to vector<16x32xf32>
    %100 = arith.addf %98, %99 : vector<16x32xf32>
    %101 = arith.addf %90, %100 : vector<16x32xf32>
    %cst_26 = arith.constant dense<0.000000e+00> : vector<16xf32>
    %102 = vector.multi_reduction <add>, %101, %cst_26 [1] : vector<16x32xf32> to vector<16xf32>
    %103 = vector.shape_cast %102 : vector<16xf32> to vector<16x1xf32>
    %cst_27 = arith.constant 3.200000e+01 : f32
    %104 = vector.broadcast %cst_27 : f32 to vector<16x1xf32>
    %105 = arith.divf %103, %104 : vector<16x1xf32>
    %106 = vector.broadcast %105 : vector<16x1xf32> to vector<16x32xf32>
    %107 = arith.subf %101, %106 : vector<16x32xf32>
    %108 = arith.mulf %107, %107 : vector<16x32xf32>
    %cst_28 = arith.constant dense<0.000000e+00> : vector<16xf32>
    %109 = vector.multi_reduction <add>, %108, %cst_28 [1] : vector<16x32xf32> to vector<16xf32>
    %110 = vector.shape_cast %109 : vector<16xf32> to vector<16x1xf32>
    %cst_29 = arith.constant 3.200000e+01 : f32
    %111 = vector.broadcast %cst_29 : f32 to vector<16x1xf32>
    %112 = arith.divf %110, %111 : vector<16x1xf32>
    %113 = vector.broadcast %105 : vector<16x1xf32> to vector<16x32xf32>
    %114 = arith.subf %101, %113 : vector<16x32xf32>
    %cst_30 = arith.constant 9.99999974E-6 : f32
    %115 = vector.broadcast %cst_30 : f32 to vector<16x1xf32>
    %116 = arith.addf %112, %115 : vector<16x1xf32>
    %117 = math.rsqrt %116 : vector<16x1xf32>
    %118 = vector.broadcast %117 : vector<16x1xf32> to vector<16x32xf32>
    %119 = arith.mulf %114, %118 : vector<16x32xf32>
    %120 = vector.broadcast %17 : vector<1x32xf32> to vector<16x32xf32>
    %121 = arith.mulf %119, %120 : vector<16x32xf32>
    %122 = vector.broadcast %18 : vector<1x32xf32> to vector<16x32xf32>
    %123 = arith.addf %121, %122 : vector<16x32xf32>
    %124 = vector.shape_cast %123 : vector<16x32xf32> to vector<2x8x32xf32>
    %c0_31 = arith.constant 0 : index
    %c0_32 = arith.constant 0 : index
    %c0_33 = arith.constant 0 : index
    %125 = vector.load %arg6[%c0_31, %c0_32, %c0_33] : memref<2x8x32xf32, #tpu.memory_space<vmem>>, vector<2x8x32xf32>
    tpu.vector_store %arg6[%c0_31, %c0_32, %c0_33], %124 {strides = array<i32>} : memref<2x8x32xf32, #tpu.memory_space<vmem>>, vector<2x8x32xf32>,
    return
  }
  func.func @transform_0(%arg0: i32, %arg1: i32) -> (i32, i32, i32) {
    %c0_i32 = arith.constant 0 : i32
    %c0_i32_0 = arith.constant 0 : i32
    %c0_i32_1 = arith.constant 0 : i32
    return %arg0, %c0_i32, %c0_i32_0 : i32, i32, i32
  }
  func.func @transform_1(%arg0: i32, %arg1: i32) -> (i32, i32, i32) {
    %c0_i32 = arith.constant 0 : i32
    %c0_i32_0 = arith.constant 0 : i32
    %c0_i32_1 = arith.constant 0 : i32
    return %arg1, %c0_i32, %c0_i32_0 : i32, i32, i32
  }
  func.func @transform_2(%arg0: i32, %arg1: i32) -> (i32, i32, i32) {
    %c0_i32 = arith.constant 0 : i32
    %c0_i32_0 = arith.constant 0 : i32
    %c0_i32_1 = arith.constant 0 : i32
    return %arg1, %c0_i32, %c0_i32_0 : i32, i32, i32
  }
  func.func @transform_3(%arg0: i32, %arg1: i32) -> (i32, i32, i32) {
    %c0_i32 = arith.constant 0 : i32
    %c0_i32_0 = arith.constant 0 : i32
    %c0_i32_1 = arith.constant 0 : i32
    return %arg1, %c0_i32, %c0_i32_0 : i32, i32, i32
  }
  func.func @transform_4(%arg0: i32, %arg1: i32) -> (i32, i32, i32) {
    %c0_i32 = arith.constant 0 : i32
    %c0_i32_0 = arith.constant 0 : i32
    %c0_i32_1 = arith.constant 0 : i32
    return %arg0, %c0_i32, %c0_i32_0 : i32, i32, i32
  }
}

</mosaic_0001>

<llo_original>
// kernel: transformer_encoder.1
$region0: #{transformer_encoder.1}
  #allocation0 [shape = 'u32[]', space=smem, size = 0x4, offset = 0x4, fixed_abs, tag = 'smem constant byte address 0x4 - core index']
  #allocation1 [shape = 'u32[144,128]{1,0:T(1,128)}', space=vmem, size = 0x12000, scoped, tag = 'internal scratch']
  %s0 = inlined_call_operand.hbm [shape: f32[2,8,32], index: 0, kind: input, shape index: {}, may-alias: {0,4}]
  %s1 = inlined_call_operand.vmem [shape: f32[2,32,160], index: 1, kind: input, shape index: {}]
  %s2 = inlined_call_operand.vmem [shape: f32[2,96,32], index: 2, kind: input, shape index: {}]
  %s3 = inlined_call_operand.vmem [shape: f32[2,8,96], index: 3, kind: input, shape index: {}]
  %s4 = inlined_call_operand.hbm [shape: f32[2,8,32], index: 4, kind: output, shape index: {}, may-alias: {0,4}]
  %s5 = sld [smem:[#allocation0]]
  $region57: #{transformer_encoder.1} parent=0
    _
  %s7 = ssub.s32 1, %s5
  %s8 = scalar_select 0, %s7, %s5
  $region1: #{transformer_encoder.1} parent=0
    #allocation2 [shape = 'u8[8192]{0}', space=vmem, size = 0x2000, scoped, tag = 'input window, operand 0, single buffered']
    #allocation3 [shape = 's32[2]{0}', space=sflag, size = 0x8, scoped, tag = 'scoped memory for transformer_encoder.1']
    #allocation4 [shape = 's32[2]{0}', space=sflag, size = 0x8, scoped, tag = 'scoped memory for transformer_encoder.1']
    #allocation5 [shape = 'u8[8192]{0}', space=vmem, size = 0x2000, scoped, tag = 'output window, operand 0, single buffered']
    %9 = vsyncpa [#allocation3], 0
    %10 = vsyncpa [#allocation4], 0
    loop: start=0, step=1, limit=4
    $region2: #{transformer_encoder.1} parent=1 // loop_pre_header
      _
    $region3: #{transformer_encoder.1} parent=1 // loop_header
      %s12 = sphi 0, %s16
      %p13 = scmp.ge.s32.totalorder %s12, 4
      %s19 = sphi 0, %s31
      %s20 = sphi 0, %s27
      %s21 = sphi 0, %s19
      %s22 = sphi 0, %s20
      %s23 = sphi 0, %s21
      %s24 = sphi 0, %s22
      %s34 = sphi 0, %s36
      %s37 = sphi 0, %s34
      %s38 = sphi 0, %s37
      %s54 = sphi 0, %s38
      %s60 = sphi 0, %s62
      %s63 = sphi 0, %s60
      %s64 = sphi 0, %s63
      %s80 = sphi 0, %s64
      %s86 = sphi 0, %s88
      %s89 = sphi 0, %s86
      %s90 = sphi 0, %s89
      %s106 = sphi 0, %s90
      %s112 = sphi 0, %s114
      %s115 = sphi 0, %s112
      %s116 = sphi 0, %s115
      %s132 = sphi 0, %s116
      %s138 = sphi 0, %s140
      %s141 = sphi 0, %s138
      %s142 = sphi 0, %s141
      %s158 = sphi 0, %s142
    $region4: #{transformer_encoder.1} parent=1 // loop_header_branch
      %15 = sbr.rel (%p13) target = $region8
    $region5: #{transformer_encoder.1} parent=1 // loop_body
      %s17 = ssub.s32 %s12, 1
      %s18 = ssub.s32 %s12, 2
      %s25 = sadd.s32 1, %s20
      %p26 = scmp.ge.s32.totalorder %s25, 2
      %s27 = scalar_select %p26, 0, %s25
      %s28 = sadd.s32 1, %s19
      %s29 = scalar_select %p26, %s28, %s19
      %p30 = scmp.ge.s32.totalorder %s29, 1
      %s31 = scalar_select %p30, 0, %s29
      %s32 = ssub.s32 %s19, %s31
      %p33 = scmp.eq.s32.totalorder %s32, 0
      %s35 = sadd.s32 %s34, 1
      %s36 = scalar_select %p33, %s34, %s35
      %p39 = pneg %p33
      %p40 = scmp.eq.s32.totalorder %s12, 1
      %p41 = por %p39, %p40
      %p42 = scmp.ne.s32.totalorder %s34, %s37
      %p43 = scmp.eq.s32.totalorder %s12, 0
      %p44 = por %p42, %p43
      %p45 = scmp.ne.s32.totalorder %s34, %s37
      %p46 = scmp.eq.s32.totalorder %s17, 1
      %p47 = por %p45, %p46
      %p48 = scmp.ne.s32.totalorder %s37, %s38
      %p49 = scmp.eq.s32.totalorder %s17, 0
      %p50 = por %p48, %p49
      %p51 = scmp.ne.s32.totalorder %s37, %s38
      %p52 = scmp.eq.s32.totalorder %s18, 1
      %p53 = por %p51, %p52
      %p55 = scmp.ne.s32.totalorder %s38, %s54
      %p56 = scmp.eq.s32.totalorder %s18, 0
      %p57 = por %p55, %p56
      %s58 = ssub.s32 %s20, %s27
      %p59 = scmp.eq.s32.totalorder %s58, 0
      %s61 = sadd.s32 %s60, 1
      %s62 = scalar_select %p59, %s60, %s61
      %p65 = pneg %p59
      %p66 = scmp.eq.s32.totalorder %s12, 1
      %p67 = por %p65, %p66
      %p68 = scmp.ne.s32.totalorder %s60, %s63
      %p69 = scmp.eq.s32.totalorder %s12, 0
      %p70 = por %p68, %p69
      %p71 = scmp.ne.s32.totalorder %s60, %s63
      %p72 = scmp.eq.s32.totalorder %s17, 1
      %p73 = por %p71, %p72
      %p74 = scmp.ne.s32.totalorder %s63, %s64
      %p75 = scmp.eq.s32.totalorder %s17, 0
      %p76 = por %p74, %p75
      %p77 = scmp.ne.s32.totalorder %s63, %s64
      %p78 = scmp.eq.s32.totalorder %s18, 1
      %p79 = por %p77, %p78
      %p81 = scmp.ne.s32.totalorder %s64, %s80
      %p82 = scmp.eq.s32.totalorder %s18, 0
      %p83 = por %p81, %p82
      %s84 = ssub.s32 %s20, %s27
      %p85 = scmp.eq.s32.totalorder %s84, 0
      %s87 = sadd.s32 %s86, 1
      %s88 = scalar_select %p85, %s86, %s87
      %p91 = pneg %p85
      %p92 = scmp.eq.s32.totalorder %s12, 1
      %p93 = por %p91, %p92
      %p94 = scmp.ne.s32.totalorder %s86, %s89
      %p95 = scmp.eq.s32.totalorder %s12, 0
      %p96 = por %p94, %p95
      %p97 = scmp.ne.s32.totalorder %s86, %s89
      %p98 = scmp.eq.s32.totalorder %s17, 1
      %p99 = por %p97, %p98
      %p100 = scmp.ne.s32.totalorder %s89, %s90
      %p101 = scmp.eq.s32.totalorder %s17, 0
      %p102 = por %p100, %p101
      %p103 = scmp.ne.s32.totalorder %s89, %s90
      %p104 = scmp.eq.s32.totalorder %s18, 1
      %p105 = por %p103, %p104
      %p107 = scmp.ne.s32.totalorder %s90, %s106
      %p108 = scmp.eq.s32.totalorder %s18, 0
      %p109 = por %p107, %p108
      %s110 = ssub.s32 %s20, %s27
      %p111 = scmp.eq.s32.totalorder %s110, 0
      %s113 = sadd.s32 %s112, 1
      %s114 = scalar_select %p111, %s112, %s113
      %p117 = pneg %p111
      %p118 = scmp.eq.s32.totalorder %s12, 1
      %p119 = por %p117, %p118
      %p120 = scmp.ne.s32.totalorder %s112, %s115
      %p121 = scmp.eq.s32.totalorder %s12, 0
      %p122 = por %p120, %p121
      %p123 = scmp.ne.s32.totalorder %s112, %s115
      %p124 = scmp.eq.s32.totalorder %s17, 1
      %p125 = por %p123, %p124
      %p126 = scmp.ne.s32.totalorder %s115, %s116
      %p127 = scmp.eq.s32.totalorder %s17, 0
      %p128 = por %p126, %p127
      %p129 = scmp.ne.s32.totalorder %s115, %s116
      %p130 = scmp.eq.s32.totalorder %s18, 1
      %p131 = por %p129, %p130
      %p133 = scmp.ne.s32.totalorder %s116, %s132
      %p134 = scmp.eq.s32.totalorder %s18, 0
      %p135 = por %p133, %p134
      %s136 = ssub.s32 %s19, %s31
      %p137 = scmp.eq.s32.totalorder %s136, 0
      %s139 = sadd.s32 %s138, 1
      %s140 = scalar_select %p137, %s138, %s139
      %p143 = pneg %p137
      %p144 = scmp.eq.s32.totalorder %s12, 1
      %p145 = por %p143, %p144
      %p146 = scmp.ne.s32.totalorder %s138, %s141
      %p147 = scmp.eq.s32.totalorder %s12, 0
      %p148 = por %p146, %p147
      %p149 = scmp.ne.s32.totalorder %s138, %s141
      %p150 = scmp.eq.s32.totalorder %s17, 1
      %p151 = por %p149, %p150
      %p152 = scmp.ne.s32.totalorder %s141, %s142
      %p153 = scmp.eq.s32.totalorder %s17, 0
      %p154 = por %p152, %p153
      %p155 = scmp.ne.s32.totalorder %s141, %s142
      %p156 = scmp.eq.s32.totalorder %s18, 1
      %p157 = por %p155, %p156
      %p159 = scmp.ne.s32.totalorder %s142, %s158
      %p160 = scmp.eq.s32.totalorder %s18, 0
      %p161 = por %p159, %p160
      %p162 = scmp.le.s32.totalorder 1, %s12
      %p163 = scmp.lt.s32.totalorder %s12, 3
      %p164 = pnand %p162, %p163
      %p165 = pneg %p164
      // Predicated region
      $region9: #{transformer_encoder.1} parent=5 // pred_check
        _
      $region10: #{transformer_encoder.1} parent=5 // pred_check_branch
        %167 = sbr.rel (%p164) target = $region12
      $region11: #{transformer_encoder.1} parent=5 // pred_region
        %s168 = ssub.s32 %s12, 1
        // Predicated region
        $region13: #{transformer_encoder.1} parent=11 // pred_check
          %p169 = pneg %p50
        $region14: #{transformer_encoder.1} parent=11 // pred_check_branch
          %171 = sbr.rel (%p169) target = $region16
        $region15: #{transformer_encoder.1} parent=11 // pred_region
          %s172 = smul.u32 2, %s21
          %s174 = ssub.s32 256, 256
          %175 = vsyncadd [#allocation3], %s174
          %s176 = smul.addr %s172, 128
          %s177 = scalar_lea.hbm %s0, %s176
          %s178 = sshll.u32 [#allocation2], 4
          %s179 = int_to_ptr.vmem [resolvable:$true] %s178
          %184 = dma.hbm_to_vmem [thread:$0]  %s177, 256, %s179, [#allocation3], 128, 128, 8
        $region16: #{transformer_encoder.1} parent=11 // pred_fallthru
          _
      $region12: #{transformer_encoder.1} parent=5 // pred_fallthru
        _
      %p185 = scmp.lt.s32.totalorder %s12, 2
      // Predicated region
      $region17: #{transformer_encoder.1} parent=5 // pred_check
        %p186 = pneg %p185
      $region18: #{transformer_encoder.1} parent=5 // pred_check_branch
        %188 = sbr.rel (%p186) target = $region20
      $region19: #{transformer_encoder.1} parent=5 // pred_region
        // Predicated region
        $region21: #{transformer_encoder.1} parent=19 // pred_check
          %p189 = pneg %p70
        $region22: #{transformer_encoder.1} parent=19 // pred_check_branch
          %191 = sbr.rel (%p189) target = $region24
        $region23: #{transformer_encoder.1} parent=19 // pred_region
          %p192 = scmp.lt.s32.totalorder %s20, 1
          %s193 = scalar_select %p192, %s20, 1
          %s194 = smul.addr %s193, 8
          %s195 = smul.addr %s194, 8
          %s196 = scalar_lea.vmem %s1, %s195
        $region24: #{transformer_encoder.1} parent=19 // pred_fallthru
          _
        // Predicated region
        $region25: #{transformer_encoder.1} parent=19 // pred_check
          %p197 = pneg %p96
        $region26: #{transformer_encoder.1} parent=19 // pred_check_branch
          %199 = sbr.rel (%p197) target = $region28
        $region27: #{transformer_encoder.1} parent=19 // pred_region
          %p200 = scmp.lt.s32.totalorder %s20, 1
          %s201 = scalar_select %p200, %s20, 1
          %s202 = smul.addr %s201, 12
          %s203 = smul.addr %s202, 8
          %s204 = scalar_lea.vmem %s2, %s203
        $region28: #{transformer_encoder.1} parent=19 // pred_fallthru
          _
        // Predicated region
        $region29: #{transformer_encoder.1} parent=19 // pred_check
          %p205 = pneg %p122
        $region30: #{transformer_encoder.1} parent=19 // pred_check_branch
          %207 = sbr.rel (%p205) target = $region32
        $region31: #{transformer_encoder.1} parent=19 // pred_region
          %p208 = scmp.lt.s32.totalorder %s20, 1
          %s209 = scalar_select %p208, %s20, 1
          %s210 = smul.addr %s209, 8
          %s211 = scalar_lea.vmem %s3, %s210
        $region32: #{transformer_encoder.1} parent=19 // pred_fallthru
          _
      $region20: #{transformer_encoder.1} parent=5 // pred_fallthru
        _
      %p212 = scmp.le.s32.totalorder 1, %s12
      %p213 = scmp.lt.s32.totalorder %s12, 3
      %p214 = pnand %p212, %p213
      %p215 = pneg %p214
      // Predicated region
      $region33: #{transformer_encoder.1} parent=5 // pred_check
        _
      $region34: #{transformer_encoder.1} parent=5 // pred_check_branch
        %217 = sbr.rel (%p214) target = $region36
      $region35: #{transformer_encoder.1} parent=5 // pred_region
        %s218 = ssub.s32 %s12, 1
        // Predicated region
        $region37: #{transformer_encoder.1} parent=35 // pred_check
          %p219 = pneg %p50
        $region38: #{transformer_encoder.1} parent=35 // pred_check_branch
          %221 = sbr.rel (%p219) target = $region40
        $region39: #{transformer_encoder.1} parent=35 // pred_region
          %222 = dma.done [#allocation3], 256
        $region40: #{transformer_encoder.1} parent=35 // pred_fallthru
          _
        %p223 = pneg %p50
        %p224 = pneg %p47
        %p225 = scmp.lt.s32.totalorder %s22, 1
        %s226 = scalar_select %p225, %s22, 1
        %s227 = smul.addr %s226, 8
        %s228 = smul.addr %s227, 8
        %s229 = scalar_lea.vmem %s1, %s228
        %p230 = pneg %p76
        %p231 = pneg %p73
        %p232 = scmp.lt.s32.totalorder %s22, 1
        %s233 = scalar_select %p232, %s22, 1
        %s234 = smul.addr %s233, 12
        %s235 = smul.addr %s234, 8
        %s236 = scalar_lea.vmem %s2, %s235
        %p237 = pneg %p102
        %p238 = pneg %p99
        %p239 = scmp.lt.s32.totalorder %s22, 1
        %s240 = scalar_select %p239, %s22, 1
        %s241 = smul.addr %s240, 8
        %s242 = scalar_lea.vmem %s3, %s241
        %p243 = pneg %p128
        %p244 = pneg %p125
        %p245 = pneg %p154
        %p246 = pneg %p151
        %s247 = smul.u32 2, %s21
        %p248 = scmp.lt.s32.totalorder %s22, 1
        %s249 = scalar_select %p248, %s22, 1
        %s250 = smul.addr %s249, 8
        %s251 = smul.addr %s250, 8
        %s252 = scalar_lea.vmem %s1, %s251
        %p253 = scmp.lt.s32.totalorder %s22, 1
        %s254 = scalar_select %p253, %s22, 1
        %s255 = smul.addr %s254, 12
        %s256 = smul.addr %s255, 8
        %s257 = scalar_lea.vmem %s2, %s256
        %p258 = scmp.lt.s32.totalorder %s22, 1
        %s259 = scalar_select %p258, %s22, 1
        %s260 = smul.addr %s259, 8
        %s261 = scalar_lea.vmem %s3, %s260
        %s262 = smul.u32 2, %s21
        %p263 = scmp.eq.s32.totalorder %s22, 0
        // Predicated region
        $region41: #{transformer_encoder.1} parent=35 // pred_check
          %p264 = pneg %p263
        $region42: #{transformer_encoder.1} parent=35 // pred_check_branch
          %266 = sbr.rel (%p264) target = $region44
        $region43: #{transformer_encoder.1} parent=35 // pred_region
          %v267 = vld [vmem:[#allocation2] sm:$0xff]
          %v268 = vld [vmem:[#allocation2 + $0x8] sm:$0xff]
          %vm269 = vcmask 261120
          %270 = vst.msk [vmem:[#allocation5] sm:$0xff] %vm269, %v267
          %271 = vst.msk [vmem:[#allocation5 + $0x8] sm:$0xff] %vm269, %v268
        $region44: #{transformer_encoder.1} parent=35 // pred_fallthru
          _
        %v272 = vld [vmem:[#allocation5] sm:$0xff]
        %v273 = vld [vmem:[#allocation5 + $0x8] sm:$0xff]
        %v274 = vld [vmem:[%s252] sm:$0xff]
        %v275 = vld [vmem:[%s252 + $0x8] sm:$0xff]
        %v276 = vld [vmem:[%s252 + $0x10] sm:$0xff]
        %v277 = vld [vmem:[%s252 + $0x18] sm:$0xff]
        %v278 = vld [vmem:[%s252 + $0x20] sm:$0xff]
        %v279 = vld [vmem:[%s252 + $0x28] sm:$0xff]
        %v280 = vld [vmem:[%s252 + $0x30] sm:$0xff]
        %v281 = vld [vmem:[%s252 + $0x38] sm:$0xff]
        %v282 = vld [vmem:[%s257] sm:$0xff]
        %v283 = vld [vmem:[%s257 + $0x8] sm:$0xff]
        %v284 = vld [vmem:[%s257 + $0x10] sm:$0xff]
        %v285 = vld [vmem:[%s257 + $0x18] sm:$0xff]
        %v286 = vld [vmem:[%s257 + $0x20] sm:$0xff]
        %v287 = vld [vmem:[%s257 + $0x28] sm:$0xff]
        %v288 = vld [vmem:[%s257 + $0x30] sm:$0xff]
        %v289 = vld [vmem:[%s257 + $0x38] sm:$0xff]
        %v290 = vld [vmem:[%s257 + $0x40] sm:$0xff]
        %v291 = vld [vmem:[%s257 + $0x48] sm:$0xff]
        %v292 = vld [vmem:[%s257 + $0x50] sm:$0xff]
        %v293 = vld [vmem:[%s257 + $0x58] sm:$0xff]
        %v294 = vld [vmem:[%s261] sm:$0xff]
        %v295 = vlaneseq
        %v296 = vshrl.u32 %v295, 7
        %v297 = vsub.s32 0, %v296
        %v298 = vrot.slane %v294, %v297
        %vm299 = vcmask 261120
        %v301 = vsel %vm299, %v272, 0
        %v304 = vsel %vm299, %v273, 0
        %306 = vmatprep.subr.mxu0 0.0
        %307 = vmatpush1.msra.mxu0 %v274
        %308 = vmatprep.subr.mxu0 0.0
        %309 = vmatpush1.msra.mxu0 %v276
        %310 = vmatprep.subr.mxu0 0.0
        %311 = vmatpush1.msra.mxu0 %v278
        %312 = vmatprep.subr.mxu0 0.0
        %313 = vmatpush1.msra.mxu0 %v280
        %314 = vmatprep.subr.mxu0 0.0
        %315 = vmatpush1.msra.mxu0 0.0
        %316 = vmatprep.subr.mxu0 0.0
        %317 = vmatpush1.msra.mxu0 0.0
        %318 = vmatprep.subr.mxu0 0.0
        %319 = vmatpush1.msra.mxu0 0.0
        %320 = vmatprep.subr.mxu0 0.0
        %321 = vmatpush1.msra.mxu0 0.0
        %322 = vmatprep.subr.mxu0 0.0
        %323 = vmatpush1.msra.mxu0 0.0
        %324 = vmatprep.subr.mxu0 0.0
        %325 = vmatpush1.msra.mxu0 0.0
        %326 = vmatprep.subr.mxu0 0.0
        %327 = vmatpush1.msra.mxu0 0.0
        %328 = vmatprep.subr.mxu0 0.0
        %329 = vmatpush1.msra.mxu0 0.0
        %330 = vmatprep.subr.mxu0 0.0
        %331 = vmatpush1.msra.mxu0 0.0
        %332 = vmatprep.subr.mxu0 0.0
        %333 = vmatpush1.msra.mxu0 0.0
        %334 = vmatprep.subr.mxu0 0.0
        %335 = vmatpush1.msra.mxu0 0.0
        %336 = vmatprep.subr.mxu0 0.0
        %337 = vmatpush1.msra.mxu0 0.0
        %338 = vmatprep.subr.mxu0 0.0
        %339 = vmatpush1.msra.mxu0 0.0
        %340 = vmatprep.subr.mxu0 0.0
        %341 = vmatpush1.msra.mxu0 0.0
        %342 = vmatprep.subr.mxu0 0.0
        %343 = vmatpush1.msra.mxu0 0.0
        %344 = vmatprep.subr.mxu0 0.0
        %345 = vmatpush1.msra.mxu0 0.0
        %346 = vmatprep.subr.mxu0 0.0
        %347 = vmatpush1.msra.mxu0 0.0
        %348 = vmatprep.subr.mxu0 0.0
        %349 = vmatpush1.msra.mxu0 0.0
        %350 = vmatprep.subr.mxu0 0.0
        %351 = vmatpush1.msra.mxu0 0.0
        %352 = vmatprep.subr.mxu0 0.0
        %353 = vmatpush1.msra.mxu0 0.0
        %354 = vmatprep.subr.mxu0 0.0
        %355 = vmatpush1.msra.mxu0 0.0
        %356 = vmatprep.subr.mxu0 0.0
        %357 = vmatpush1.msra.mxu0 0.0
        %358 = vmatprep.subr.mxu0 0.0
        %359 = vmatpush1.msra.mxu0 0.0
        %360 = vmatprep.subr.mxu0 0.0
        %361 = vmatpush1.msra.mxu0 0.0
        %362 = vmatprep.subr.mxu0 0.0
        %363 = vmatpush1.msra.mxu0 0.0
        %364 = vmatprep.subr.mxu0 0.0
        %365 = vmatpush1.msra.mxu0 0.0
        %366 = vmatprep.subr.mxu0 0.0
        %367 = vmatpush1.msra.mxu0 0.0
        %368 = vmatprep.subr.mxu0 0.0
        %369 = vmatpush1.msra.mxu0 0.0
        %370 = vmatprep.mubr.f32.mxu0 0.0
        %371 = vmatmul.mubr.f32.gmra.mrb[0].mxu0 %v301
        %v372 = vpop.f32.mrb[0].mxu0
        %v373 = vadd.f32 %v298, %v372
        %v374 = vpop.f32.mrb[0].mxu0
        %375 = vmatprep.mubr.f32.mxu0 0.0
        %376 = vmatmul.mubr.f32.gmra.mrb[0].mxu0 %v304
        %v377 = vpop.f32.mrb[0].mxu0
        %v378 = vadd.f32 %v298, %v377
        %v379 = vpop.f32.mrb[0].mxu0
        %380 = vdwg.mxu0
        %383 = vrot.lane.b32.xlu0 %v373, 120
        %v384 = vpop.permute.xlu0 %383
        %385 = vrot.lane.b32.xlu0 %v378, 120
        %v386 = vpop.permute.xlu0 %385
        %387 = vrot.lane.b32.xlu0 %v373, 112
        %v388 = vpop.permute.xlu0 %387
        %389 = vrot.lane.b32.xlu0 %v378, 112
        %v390 = vpop.permute.xlu0 %389
        %391 = vrot.lane.b32.xlu0 %v373, 104
        %v392 = vpop.permute.xlu0 %391
        %393 = vrot.lane.b32.xlu0 %v378, 104
        %v394 = vpop.permute.xlu0 %393
        %395 = vrot.lane.b32.xlu0 %v373, 96
        %v396 = vpop.permute.xlu0 %395
        %vm397 = vcmask 64512
        %v398 = vsel %vm397, %v373, 0
        %v400 = vsel %vm397, %v396, 0
        %402 = vmatprep.subr.mxu0 0.0
        %403 = vmatpush1.xpose.msra.mxu0 %v400
        %404 = vmatprep.subr.mxu0 0.0
        %405 = vmatpush1.xpose.msra.mxu0 0.0
        %406 = vmatprep.subr.mxu0 0.0
        %407 = vmatpush1.xpose.msra.mxu0 0.0
        %408 = vmatprep.subr.mxu0 0.0
        %409 = vmatpush1.xpose.msra.mxu0 0.0
        %410 = vmatprep.subr.mxu0 0.0
        %411 = vmatpush1.xpose.msra.mxu0 0.0
        %412 = vmatprep.subr.mxu0 0.0
        %413 = vmatpush1.xpose.msra.mxu0 0.0
        %414 = vmatprep.subr.mxu0 0.0
        %415 = vmatpush1.xpose.msra.mxu0 0.0
        %416 = vmatprep.subr.mxu0 0.0
        %417 = vmatpush1.xpose.msra.mxu0 0.0
        %418 = vmatprep.subr.mxu0 0.0
        %419 = vmatpush1.xpose.msra.mxu0 0.0
        %420 = vmatprep.subr.mxu0 0.0
        %421 = vmatpush1.xpose.msra.mxu0 0.0
        %422 = vmatprep.subr.mxu0 0.0
        %423 = vmatpush1.xpose.msra.mxu0 0.0
        %424 = vmatprep.subr.mxu0 0.0
        %425 = vmatpush1.xpose.msra.mxu0 0.0
        %426 = vmatprep.subr.mxu0 0.0
        %427 = vmatpush1.xpose.msra.mxu0 0.0
        %428 = vmatprep.subr.mxu0 0.0
        %429 = vmatpush1.xpose.msra.mxu0 0.0
        %430 = vmatprep.subr.mxu0 0.0
        %431 = vmatpush1.xpose.msra.mxu0 0.0
        %432 = vmatprep.subr.mxu0 0.0
        %433 = vmatpush1.xpose.msra.mxu0 0.0
        %434 = vmatprep.subr.mxu0 0.0
        %435 = vmatpush1.xpose.msra.mxu0 0.0
        %436 = vmatprep.subr.mxu0 0.0
        %437 = vmatpush1.xpose.msra.mxu0 0.0
        %438 = vmatprep.subr.mxu0 0.0
        %439 = vmatpush1.xpose.msra.mxu0 0.0
        %440 = vmatprep.subr.mxu0 0.0
        %441 = vmatpush1.xpose.msra.mxu0 0.0
        %442 = vmatprep.subr.mxu0 0.0
        %443 = vmatpush1.xpose.msra.mxu0 0.0
        %444 = vmatprep.subr.mxu0 0.0
        %445 = vmatpush1.xpose.msra.mxu0 0.0
        %446 = vmatprep.subr.mxu0 0.0
        %447 = vmatpush1.xpose.msra.mxu0 0.0
        %448 = vmatprep.subr.mxu0 0.0
        %449 = vmatpush1.xpose.msra.mxu0 0.0
        %450 = vmatprep.subr.mxu0 0.0
        %451 = vmatpush1.xpose.msra.mxu0 0.0
        %452 = vmatprep.subr.mxu0 0.0
        %453 = vmatpush1.xpose.msra.mxu0 0.0
        %454 = vmatprep.subr.mxu0 0.0
        %455 = vmatpush1.xpose.msra.mxu0 0.0
        %456 = vmatprep.subr.mxu0 0.0
        %457 = vmatpush1.xpose.msra.mxu0 0.0
        %458 = vmatprep.subr.mxu0 0.0
        %459 = vmatpush1.xpose.msra.mxu0 0.0
        %460 = vmatprep.subr.mxu0 0.0
        %461 = vmatpush1.xpose.msra.mxu0 0.0
        %462 = vmatprep.subr.mxu0 0.0
        %463 = vmatpush1.xpose.msra.mxu0 0.0
        %464 = vmatprep.subr.mxu0 0.0
        %465 = vmatpush1.xpose.msra.mxu0 0.0
        %466 = vmatprep.mubr.f32.mxu0 0.0
        %467 = vmatmul.mubr.f32.gmra.mrb[0].mxu0 %v398
        %v468 = vpop.f32.mrb[0].mxu0
        %v469 = vadd.f32 0.0, %v468
        %v470 = vpop.f32.mrb[0].mxu0
        %471 = vdwg.mxu0
        %472 = vrot.lane.b32.xlu0 %v378, 96
        %v473 = vpop.permute.xlu0 %472
        %v474 = vsel %vm397, %v378, 0
        %v476 = vsel %vm397, %v473, 0
        %478 = vmatprep.subr.mxu0 0.0
        %479 = vmatpush1.xpose.msra.mxu0 %v476
        %480 = vmatprep.subr.mxu0 0.0
        %481 = vmatpush1.xpose.msra.mxu0 0.0
        %482 = vmatprep.subr.mxu0 0.0
        %483 = vmatpush1.xpose.msra.mxu0 0.0
        %484 = vmatprep.subr.mxu0 0.0
        %485 = vmatpush1.xpose.msra.mxu0 0.0
        %486 = vmatprep.subr.mxu0 0.0
        %487 = vmatpush1.xpose.msra.mxu0 0.0
        %488 = vmatprep.subr.mxu0 0.0
        %489 = vmatpush1.xpose.msra.mxu0 0.0
        %490 = vmatprep.subr.mxu0 0.0
        %491 = vmatpush1.xpose.msra.mxu0 0.0
        %492 = vmatprep.subr.mxu0 0.0
        %493 = vmatpush1.xpose.msra.mxu0 0.0
        %494 = vmatprep.subr.mxu0 0.0
        %495 = vmatpush1.xpose.msra.mxu0 0.0
        %496 = vmatprep.subr.mxu0 0.0
        %497 = vmatpush1.xpose.msra.mxu0 0.0
        %498 = vmatprep.subr.mxu0 0.0
        %499 = vmatpush1.xpose.msra.mxu0 0.0
        %500 = vmatprep.subr.mxu0 0.0
        %501 = vmatpush1.xpose.msra.mxu0 0.0
        %502 = vmatprep.subr.mxu0 0.0
        %503 = vmatpush1.xpose.msra.mxu0 0.0
        %504 = vmatprep.subr.mxu0 0.0
        %505 = vmatpush1.xpose.msra.mxu0 0.0
        %506 = vmatprep.subr.mxu0 0.0
        %507 = vmatpush1.xpose.msra.mxu0 0.0
        %508 = vmatprep.subr.mxu0 0.0
        %509 = vmatpush1.xpose.msra.mxu0 0.0
        %510 = vmatprep.subr.mxu0 0.0
        %511 = vmatpush1.xpose.msra.mxu0 0.0
        %512 = vmatprep.subr.mxu0 0.0
        %513 = vmatpush1.xpose.msra.mxu0 0.0
        %514 = vmatprep.subr.mxu0 0.0
        %515 = vmatpush1.xpose.msra.mxu0 0.0
        %516 = vmatprep.subr.mxu0 0.0
        %517 = vmatpush1.xpose.msra.mxu0 0.0
        %518 = vmatprep.subr.mxu0 0.0
        %519 = vmatpush1.xpose.msra.mxu0 0.0
        %520 = vmatprep.subr.mxu0 0.0
        %521 = vmatpush1.xpose.msra.mxu0 0.0
        %522 = vmatprep.subr.mxu0 0.0
        %523 = vmatpush1.xpose.msra.mxu0 0.0
        %524 = vmatprep.subr.mxu0 0.0
        %525 = vmatpush1.xpose.msra.mxu0 0.0
        %526 = vmatprep.subr.mxu0 0.0
        %527 = vmatpush1.xpose.msra.mxu0 0.0
        %528 = vmatprep.subr.mxu0 0.0
        %529 = vmatpush1.xpose.msra.mxu0 0.0
        %530 = vmatprep.subr.mxu0 0.0
        %531 = vmatpush1.xpose.msra.mxu0 0.0
        %532 = vmatprep.subr.mxu0 0.0
        %533 = vmatpush1.xpose.msra.mxu0 0.0
        %534 = vmatprep.subr.mxu0 0.0
        %535 = vmatpush1.xpose.msra.mxu0 0.0
        %536 = vmatprep.subr.mxu0 0.0
        %537 = vmatpush1.xpose.msra.mxu0 0.0
        %538 = vmatprep.subr.mxu0 0.0
        %539 = vmatpush1.xpose.msra.mxu0 0.0
        %540 = vmatprep.subr.mxu0 0.0
        %541 = vmatpush1.xpose.msra.mxu0 0.0
        %542 = vmatprep.mubr.f32.mxu0 0.0
        %543 = vmatmul.mubr.f32.gmra.mrb[0].mxu0 %v474
        %v544 = vpop.f32.mrb[0].mxu0
        %v545 = vadd.f32 0.0, %v544
        %v546 = vpop.f32.mrb[0].mxu0
        %547 = vdwg.mxu0
        %548 = vrot.lane.b32.xlu0 %v384, 96
        %v549 = vpop.permute.xlu0 %548
        %v550 = vsel %vm397, %v384, 0
        %v552 = vsel %vm397, %v549, 0
        %554 = vmatprep.subr.mxu0 0.0
        %555 = vmatpush1.xpose.msra.mxu0 %v552
        %556 = vmatprep.subr.mxu0 0.0
        %557 = vmatpush1.xpose.msra.mxu0 0.0
        %558 = vmatprep.subr.mxu0 0.0
        %559 = vmatpush1.xpose.msra.mxu0 0.0
        %560 = vmatprep.subr.mxu0 0.0
        %561 = vmatpush1.xpose.msra.mxu0 0.0
        %562 = vmatprep.subr.mxu0 0.0
        %563 = vmatpush1.xpose.msra.mxu0 0.0
        %564 = vmatprep.subr.mxu0 0.0
        %565 = vmatpush1.xpose.msra.mxu0 0.0
        %566 = vmatprep.subr.mxu0 0.0
        %567 = vmatpush1.xpose.msra.mxu0 0.0
        %568 = vmatprep.subr.mxu0 0.0
        %569 = vmatpush1.xpose.msra.mxu0 0.0
        %570 = vmatprep.subr.mxu0 0.0
        %571 = vmatpush1.xpose.msra.mxu0 0.0
        %572 = vmatprep.subr.mxu0 0.0
        %573 = vmatpush1.xpose.msra.mxu0 0.0
        %574 = vmatprep.subr.mxu0 0.0
        %575 = vmatpush1.xpose.msra.mxu0 0.0
        %576 = vmatprep.subr.mxu0 0.0
        %577 = vmatpush1.xpose.msra.mxu0 0.0
        %578 = vmatprep.subr.mxu0 0.0
        %579 = vmatpush1.xpose.msra.mxu0 0.0
        %580 = vmatprep.subr.mxu0 0.0
        %581 = vmatpush1.xpose.msra.mxu0 0.0
        %582 = vmatprep.subr.mxu0 0.0
        %583 = vmatpush1.xpose.msra.mxu0 0.0
        %584 = vmatprep.subr.mxu0 0.0
        %585 = vmatpush1.xpose.msra.mxu0 0.0
        %586 = vmatprep.subr.mxu0 0.0
        %587 = vmatpush1.xpose.msra.mxu0 0.0
        %588 = vmatprep.subr.mxu0 0.0
        %589 = vmatpush1.xpose.msra.mxu0 0.0
        %590 = vmatprep.subr.mxu0 0.0
        %591 = vmatpush1.xpose.msra.mxu0 0.0
        %592 = vmatprep.subr.mxu0 0.0
        %593 = vmatpush1.xpose.msra.mxu0 0.0
        %594 = vmatprep.subr.mxu0 0.0
        %595 = vmatpush1.xpose.msra.mxu0 0.0
        %596 = vmatprep.subr.mxu0 0.0
        %597 = vmatpush1.xpose.msra.mxu0 0.0
        %598 = vmatprep.subr.mxu0 0.0
        %599 = vmatpush1.xpose.msra.mxu0 0.0
        %600 = vmatprep.subr.mxu0 0.0
        %601 = vmatpush1.xpose.msra.mxu0 0.0
        %602 = vmatprep.subr.mxu0 0.0
        %603 = vmatpush1.xpose.msra.mxu0 0.0
        %604 = vmatprep.subr.mxu0 0.0
        %605 = vmatpush1.xpose.msra.mxu0 0.0
        %606 = vmatprep.subr.mxu0 0.0
        %607 = vmatpush1.xpose.msra.mxu0 0.0
        %608 = vmatprep.subr.mxu0 0.0
        %609 = vmatpush1.xpose.msra.mxu0 0.0
        %610 = vmatprep.subr.mxu0 0.0
        %611 = vmatpush1.xpose.msra.mxu0 0.0
        %612 = vmatprep.subr.mxu0 0.0
        %613 = vmatpush1.xpose.msra.mxu0 0.0
        %614 = vmatprep.subr.mxu0 0.0
        %615 = vmatpush1.xpose.msra.mxu0 0.0
        %616 = vmatprep.subr.mxu0 0.0
        %617 = vmatpush1.xpose.msra.mxu0 0.0
        %618 = vmatprep.mubr.f32.mxu0 0.0
        %619 = vmatmul.mubr.f32.gmra.mrb[0].mxu0 %v550
        %v620 = vpop.f32.mrb[0].mxu0
        %v621 = vadd.f32 0.0, %v620
        %v622 = vpop.f32.mrb[0].mxu0
        %623 = vdwg.mxu0
        %624 = vrot.lane.b32.xlu0 %v386, 96
        %v625 = vpop.permute.xlu0 %624
        %v626 = vsel %vm397, %v386, 0
        %v628 = vsel %vm397, %v625, 0
        %630 = vmatprep.subr.mxu0 0.0
        %631 = vmatpush1.xpose.msra.mxu0 %v628
        %632 = vmatprep.subr.mxu0 0.0
        %633 = vmatpush1.xpose.msra.mxu0 0.0
        %634 = vmatprep.subr.mxu0 0.0
        %635 = vmatpush1.xpose.msra.mxu0 0.0
        %636 = vmatprep.subr.mxu0 0.0
        %637 = vmatpush1.xpose.msra.mxu0 0.0
        %638 = vmatprep.subr.mxu0 0.0
        %639 = vmatpush1.xpose.msra.mxu0 0.0
        %640 = vmatprep.subr.mxu0 0.0
        %641 = vmatpush1.xpose.msra.mxu0 0.0
        %642 = vmatprep.subr.mxu0 0.0
        %643 = vmatpush1.xpose.msra.mxu0 0.0
        %644 = vmatprep.subr.mxu0 0.0
        %645 = vmatpush1.xpose.msra.mxu0 0.0
        %646 = vmatprep.subr.mxu0 0.0
        %647 = vmatpush1.xpose.msra.mxu0 0.0
        %648 = vmatprep.subr.mxu0 0.0
        %649 = vmatpush1.xpose.msra.mxu0 0.0
        %650 = vmatprep.subr.mxu0 0.0
        %651 = vmatpush1.xpose.msra.mxu0 0.0
        %652 = vmatprep.subr.mxu0 0.0
        %653 = vmatpush1.xpose.msra.mxu0 0.0
        %654 = vmatprep.subr.mxu0 0.0
        %655 = vmatpush1.xpose.msra.mxu0 0.0
        %656 = vmatprep.subr.mxu0 0.0
        %657 = vmatpush1.xpose.msra.mxu0 0.0
        %658 = vmatprep.subr.mxu0 0.0
        %659 = vmatpush1.xpose.msra.mxu0 0.0
        %660 = vmatprep.subr.mxu0 0.0
        %661 = vmatpush1.xpose.msra.mxu0 0.0
        %662 = vmatprep.subr.mxu0 0.0
        %663 = vmatpush1.xpose.msra.mxu0 0.0
        %664 = vmatprep.subr.mxu0 0.0
        %665 = vmatpush1.xpose.msra.mxu0 0.0
        %666 = vmatprep.subr.mxu0 0.0
        %667 = vmatpush1.xpose.msra.mxu0 0.0
        %668 = vmatprep.subr.mxu0 0.0
        %669 = vmatpush1.xpose.msra.mxu0 0.0
        %670 = vmatprep.subr.mxu0 0.0
        %671 = vmatpush1.xpose.msra.mxu0 0.0
        %672 = vmatprep.subr.mxu0 0.0
        %673 = vmatpush1.xpose.msra.mxu0 0.0
        %674 = vmatprep.subr.mxu0 0.0
        %675 = vmatpush1.xpose.msra.mxu0 0.0
        %676 = vmatprep.subr.mxu0 0.0
        %677 = vmatpush1.xpose.msra.mxu0 0.0
        %678 = vmatprep.subr.mxu0 0.0
        %679 = vmatpush1.xpose.msra.mxu0 0.0
        %680 = vmatprep.subr.mxu0 0.0
        %681 = vmatpush1.xpose.msra.mxu0 0.0
        %682 = vmatprep.subr.mxu0 0.0
        %683 = vmatpush1.xpose.msra.mxu0 0.0
        %684 = vmatprep.subr.mxu0 0.0
        %685 = vmatpush1.xpose.msra.mxu0 0.0
        %686 = vmatprep.subr.mxu0 0.0
        %687 = vmatpush1.xpose.msra.mxu0 0.0
        %688 = vmatprep.subr.mxu0 0.0
        %689 = vmatpush1.xpose.msra.mxu0 0.0
        %690 = vmatprep.subr.mxu0 0.0
        %691 = vmatpush1.xpose.msra.mxu0 0.0
        %692 = vmatprep.subr.mxu0 0.0
        %693 = vmatpush1.xpose.msra.mxu0 0.0
        %694 = vmatprep.mubr.f32.mxu0 0.0
        %695 = vmatmul.mubr.f32.gmra.mrb[0].mxu0 %v626
        %v696 = vpop.f32.mrb[0].mxu0
        %v697 = vadd.f32 0.0, %v696
        %v698 = vpop.f32.mrb[0].mxu0
        %699 = vdwg.mxu0
        %700 = vrot.lane.b32.xlu0 %v388, 96
        %v701 = vpop.permute.xlu0 %700
        %v702 = vsel %vm397, %v388, 0
        %v704 = vsel %vm397, %v701, 0
        %706 = vmatprep.subr.mxu0 0.0
        %707 = vmatpush1.xpose.msra.mxu0 %v704
        %708 = vmatprep.subr.mxu0 0.0
        %709 = vmatpush1.xpose.msra.mxu0 0.0
        %710 = vmatprep.subr.mxu0 0.0
        %711 = vmatpush1.xpose.msra.mxu0 0.0
        %712 = vmatprep.subr.mxu0 0.0
        %713 = vmatpush1.xpose.msra.mxu0 0.0
        %714 = vmatprep.subr.mxu0 0.0
        %715 = vmatpush1.xpose.msra.mxu0 0.0
        %716 = vmatprep.subr.mxu0 0.0
        %717 = vmatpush1.xpose.msra.mxu0 0.0
        %718 = vmatprep.subr.mxu0 0.0
        %719 = vmatpush1.xpose.msra.mxu0 0.0
        %720 = vmatprep.subr.mxu0 0.0
        %721 = vmatpush1.xpose.msra.mxu0 0.0
        %722 = vmatprep.subr.mxu0 0.0
        %723 = vmatpush1.xpose.msra.mxu0 0.0
        %724 = vmatprep.subr.mxu0 0.0
        %725 = vmatpush1.xpose.msra.mxu0 0.0
        %726 = vmatprep.subr.mxu0 0.0
        %727 = vmatpush1.xpose.msra.mxu0 0.0
        %728 = vmatprep.subr.mxu0 0.0
        %729 = vmatpush1.xpose.msra.mxu0 0.0
        %730 = vmatprep.subr.mxu0 0.0
        %731 = vmatpush1.xpose.msra.mxu0 0.0
        %732 = vmatprep.subr.mxu0 0.0
        %733 = vmatpush1.xpose.msra.mxu0 0.0
        %734 = vmatprep.subr.mxu0 0.0
        %735 = vmatpush1.xpose.msra.mxu0 0.0
        %736 = vmatprep.subr.mxu0 0.0
        %737 = vmatpush1.xpose.msra.mxu0 0.0
        %738 = vmatprep.subr.mxu0 0.0
        %739 = vmatpush1.xpose.msra.mxu0 0.0
        %740 = vmatprep.subr.mxu0 0.0
        %741 = vmatpush1.xpose.msra.mxu0 0.0
        %742 = vmatprep.subr.mxu0 0.0
        %743 = vmatpush1.xpose.msra.mxu0 0.0
        %744 = vmatprep.subr.mxu0 0.0
        %745 = vmatpush1.xpose.msra.mxu0 0.0
        %746 = vmatprep.subr.mxu0 0.0
        %747 = vmatpush1.xpose.msra.mxu0 0.0
        %748 = vmatprep.subr.mxu0 0.0
        %749 = vmatpush1.xpose.msra.mxu0 0.0
        %750 = vmatprep.subr.mxu0 0.0
        %751 = vmatpush1.xpose.msra.mxu0 0.0
        %752 = vmatprep.subr.mxu0 0.0
        %753 = vmatpush1.xpose.msra.mxu0 0.0
        %754 = vmatprep.subr.mxu0 0.0
        %755 = vmatpush1.xpose.msra.mxu0 0.0
        %756 = vmatprep.subr.mxu0 0.0
        %757 = vmatpush1.xpose.msra.mxu0 0.0
        %758 = vmatprep.subr.mxu0 0.0
        %759 = vmatpush1.xpose.msra.mxu0 0.0
        %760 = vmatprep.subr.mxu0 0.0
        %761 = vmatpush1.xpose.msra.mxu0 0.0
        %762 = vmatprep.subr.mxu0 0.0
        %763 = vmatpush1.xpose.msra.mxu0 0.0
        %764 = vmatprep.subr.mxu0 0.0
        %765 = vmatpush1.xpose.msra.mxu0 0.0
        %766 = vmatprep.subr.mxu0 0.0
        %767 = vmatpush1.xpose.msra.mxu0 0.0
        %768 = vmatprep.subr.mxu0 0.0
        %769 = vmatpush1.xpose.msra.mxu0 0.0
        %770 = vmatprep.mubr.f32.mxu0 0.0
        %771 = vmatmul.mubr.f32.gmra.mrb[0].mxu0 %v702
        %v772 = vpop.f32.mrb[0].mxu0
        %v773 = vadd.f32 0.0, %v772
        %v774 = vpop.f32.mrb[0].mxu0
        %775 = vdwg.mxu0
        %776 = vrot.lane.b32.xlu0 %v390, 96
        %v777 = vpop.permute.xlu0 %776
        %v778 = vsel %vm397, %v390, 0
        %v780 = vsel %vm397, %v777, 0
        %782 = vmatprep.subr.mxu0 0.0
        %783 = vmatpush1.xpose.msra.mxu0 %v780
        %784 = vmatprep.subr.mxu0 0.0
        %785 = vmatpush1.xpose.msra.mxu0 0.0
        %786 = vmatprep.subr.mxu0 0.0
        %787 = vmatpush1.xpose.msra.mxu0 0.0
        %788 = vmatprep.subr.mxu0 0.0
        %789 = vmatpush1.xpose.msra.mxu0 0.0
        %790 = vmatprep.subr.mxu0 0.0
        %791 = vmatpush1.xpose.msra.mxu0 0.0
        %792 = vmatprep.subr.mxu0 0.0
        %793 = vmatpush1.xpose.msra.mxu0 0.0
        %794 = vmatprep.subr.mxu0 0.0
        %795 = vmatpush1.xpose.msra.mxu0 0.0
        %796 = vmatprep.subr.mxu0 0.0
        %797 = vmatpush1.xpose.msra.mxu0 0.0
        %798 = vmatprep.subr.mxu0 0.0
        %799 = vmatpush1.xpose.msra.mxu0 0.0
        %800 = vmatprep.subr.mxu0 0.0
        %801 = vmatpush1.xpose.msra.mxu0 0.0
        %802 = vmatprep.subr.mxu0 0.0
        %803 = vmatpush1.xpose.msra.mxu0 0.0
        %804 = vmatprep.subr.mxu0 0.0
        %805 = vmatpush1.xpose.msra.mxu0 0.0
        %806 = vmatprep.subr.mxu0 0.0
        %807 = vmatpush1.xpose.msra.mxu0 0.0
        %808 = vmatprep.subr.mxu0 0.0
        %809 = vmatpush1.xpose.msra.mxu0 0.0
        %810 = vmatprep.subr.mxu0 0.0
        %811 = vmatpush1.xpose.msra.mxu0 0.0
        %812 = vmatprep.subr.mxu0 0.0
        %813 = vmatpush1.xpose.msra.mxu0 0.0
        %814 = vmatprep.subr.mxu0 0.0
        %815 = vmatpush1.xpose.msra.mxu0 0.0
        %816 = vmatprep.subr.mxu0 0.0
        %817 = vmatpush1.xpose.msra.mxu0 0.0
        %818 = vmatprep.subr.mxu0 0.0
        %819 = vmatpush1.xpose.msra.mxu0 0.0
        %820 = vmatprep.subr.mxu0 0.0
        %821 = vmatpush1.xpose.msra.mxu0 0.0
        %822 = vmatprep.subr.mxu0 0.0
        %823 = vmatpush1.xpose.msra.mxu0 0.0
        %824 = vmatprep.subr.mxu0 0.0
        %825 = vmatpush1.xpose.msra.mxu0 0.0
        %826 = vmatprep.subr.mxu0 0.0
        %827 = vmatpush1.xpose.msra.mxu0 0.0
        %828 = vmatprep.subr.mxu0 0.0
        %829 = vmatpush1.xpose.msra.mxu0 0.0
        %830 = vmatprep.subr.mxu0 0.0
        %831 = vmatpush1.xpose.msra.mxu0 0.0
        %832 = vmatprep.subr.mxu0 0.0
        %833 = vmatpush1.xpose.msra.mxu0 0.0
        %834 = vmatprep.subr.mxu0 0.0
        %835 = vmatpush1.xpose.msra.mxu0 0.0
        %836 = vmatprep.subr.mxu0 0.0
        %837 = vmatpush1.xpose.msra.mxu0 0.0
        %838 = vmatprep.subr.mxu0 0.0
        %839 = vmatpush1.xpose.msra.mxu0 0.0
        %840 = vmatprep.subr.mxu0 0.0
        %841 = vmatpush1.xpose.msra.mxu0 0.0
        %842 = vmatprep.subr.mxu0 0.0
        %843 = vmatpush1.xpose.msra.mxu0 0.0
        %844 = vmatprep.subr.mxu0 0.0
        %845 = vmatpush1.xpose.msra.mxu0 0.0
        %846 = vmatprep.mubr.f32.mxu0 0.0
        %847 = vmatmul.mubr.f32.gmra.mrb[0].mxu0 %v778
        %v848 = vpop.f32.mrb[0].mxu0
        %v849 = vadd.f32 0.0, %v848
        %v850 = vpop.f32.mrb[0].mxu0
        %851 = vdwg.mxu0
        %852 = vrot.lane.b32.xlu0 %v392, 96
        %v853 = vpop.permute.xlu0 %852
        %v854 = vsel %vm397, %v392, 0
        %v856 = vsel %vm397, %v853, 0
        %858 = vmatprep.subr.mxu0 0.0
        %859 = vmatpush1.xpose.msra.mxu0 %v856
        %860 = vmatprep.subr.mxu0 0.0
        %861 = vmatpush1.xpose.msra.mxu0 0.0
        %862 = vmatprep.subr.mxu0 0.0
        %863 = vmatpush1.xpose.msra.mxu0 0.0
        %864 = vmatprep.subr.mxu0 0.0
        %865 = vmatpush1.xpose.msra.mxu0 0.0
        %866 = vmatprep.subr.mxu0 0.0
        %867 = vmatpush1.xpose.msra.mxu0 0.0
        %868 = vmatprep.subr.mxu0 0.0
        %869 = vmatpush1.xpose.msra.mxu0 0.0
        %870 = vmatprep.subr.mxu0 0.0
        %871 = vmatpush1.xpose.msra.mxu0 0.0
        %872 = vmatprep.subr.mxu0 0.0
        %873 = vmatpush1.xpose.msra.mxu0 0.0
        %874 = vmatprep.subr.mxu0 0.0
        %875 = vmatpush1.xpose.msra.mxu0 0.0
        %876 = vmatprep.subr.mxu0 0.0
        %877 = vmatpush1.xpose.msra.mxu0 0.0
        %878 = vmatprep.subr.mxu0 0.0
        %879 = vmatpush1.xpose.msra.mxu0 0.0
        %880 = vmatprep.subr.mxu0 0.0
        %881 = vmatpush1.xpose.msra.mxu0 0.0
        %882 = vmatprep.subr.mxu0 0.0
        %883 = vmatpush1.xpose.msra.mxu0 0.0
        %884 = vmatprep.subr.mxu0 0.0
        %885 = vmatpush1.xpose.msra.mxu0 0.0
        %886 = vmatprep.subr.mxu0 0.0
        %887 = vmatpush1.xpose.msra.mxu0 0.0
        %888 = vmatprep.subr.mxu0 0.0
        %889 = vmatpush1.xpose.msra.mxu0 0.0
        %890 = vmatprep.subr.mxu0 0.0
        %891 = vmatpush1.xpose.msra.mxu0 0.0
        %892 = vmatprep.subr.mxu0 0.0
        %893 = vmatpush1.xpose.msra.mxu0 0.0
        %894 = vmatprep.subr.mxu0 0.0
        %895 = vmatpush1.xpose.msra.mxu0 0.0
        %896 = vmatprep.subr.mxu0 0.0
        %897 = vmatpush1.xpose.msra.mxu0 0.0
        %898 = vmatprep.subr.mxu0 0.0
        %899 = vmatpush1.xpose.msra.mxu0 0.0
        %900 = vmatprep.subr.mxu0 0.0
        %901 = vmatpush1.xpose.msra.mxu0 0.0
        %902 = vmatprep.subr.mxu0 0.0
        %903 = vmatpush1.xpose.msra.mxu0 0.0
        %904 = vmatprep.subr.mxu0 0.0
        %905 = vmatpush1.xpose.msra.mxu0 0.0
        %906 = vmatprep.subr.mxu0 0.0
        %907 = vmatpush1.xpose.msra.mxu0 0.0
        %908 = vmatprep.subr.mxu0 0.0
        %909 = vmatpush1.xpose.msra.mxu0 0.0
        %910 = vmatprep.subr.mxu0 0.0
        %911 = vmatpush1.xpose.msra.mxu0 0.0
        %912 = vmatprep.subr.mxu0 0.0
        %913 = vmatpush1.xpose.msra.mxu0 0.0
        %914 = vmatprep.subr.mxu0 0.0
        %915 = vmatpush1.xpose.msra.mxu0 0.0
        %916 = vmatprep.subr.mxu0 0.0
        %917 = vmatpush1.xpose.msra.mxu0 0.0
        %918 = vmatprep.subr.mxu0 0.0
        %919 = vmatpush1.xpose.msra.mxu0 0.0
        %920 = vmatprep.subr.mxu0 0.0
        %921 = vmatpush1.xpose.msra.mxu0 0.0
        %922 = vmatprep.mubr.f32.mxu0 0.0
        %923 = vmatmul.mubr.f32.gmra.mrb[0].mxu0 %v854
        %v924 = vpop.f32.mrb[0].mxu0
        %v925 = vadd.f32 0.0, %v924
        %v926 = vpop.f32.mrb[0].mxu0
        %927 = vdwg.mxu0
        %928 = vrot.lane.b32.xlu0 %v394, 96
        %v929 = vpop.permute.xlu0 %928
        %v930 = vsel %vm397, %v394, 0
        %v932 = vsel %vm397, %v929, 0
        %934 = vmatprep.subr.mxu0 0.0
        %935 = vmatpush1.xpose.msra.mxu0 %v932
        %936 = vmatprep.subr.mxu0 0.0
        %937 = vmatpush1.xpose.msra.mxu0 0.0
        %938 = vmatprep.subr.mxu0 0.0
        %939 = vmatpush1.xpose.msra.mxu0 0.0
        %940 = vmatprep.subr.mxu0 0.0
        %941 = vmatpush1.xpose.msra.mxu0 0.0
        %942 = vmatprep.subr.mxu0 0.0
        %943 = vmatpush1.xpose.msra.mxu0 0.0
        %944 = vmatprep.subr.mxu0 0.0
        %945 = vmatpush1.xpose.msra.mxu0 0.0
        %946 = vmatprep.subr.mxu0 0.0
        %947 = vmatpush1.xpose.msra.mxu0 0.0
        %948 = vmatprep.subr.mxu0 0.0
        %949 = vmatpush1.xpose.msra.mxu0 0.0
        %950 = vmatprep.subr.mxu0 0.0
        %951 = vmatpush1.xpose.msra.mxu0 0.0
        %952 = vmatprep.subr.mxu0 0.0
        %953 = vmatpush1.xpose.msra.mxu0 0.0
        %954 = vmatprep.subr.mxu0 0.0
        %955 = vmatpush1.xpose.msra.mxu0 0.0
        %956 = vmatprep.subr.mxu0 0.0
        %957 = vmatpush1.xpose.msra.mxu0 0.0
        %958 = vmatprep.subr.mxu0 0.0
        %959 = vmatpush1.xpose.msra.mxu0 0.0
        %960 = vmatprep.subr.mxu0 0.0
        %961 = vmatpush1.xpose.msra.mxu0 0.0
        %962 = vmatprep.subr.mxu0 0.0
        %963 = vmatpush1.xpose.msra.mxu0 0.0
        %964 = vmatprep.subr.mxu0 0.0
        %965 = vmatpush1.xpose.msra.mxu0 0.0
        %966 = vmatprep.subr.mxu0 0.0
        %967 = vmatpush1.xpose.msra.mxu0 0.0
        %968 = vmatprep.subr.mxu0 0.0
        %969 = vmatpush1.xpose.msra.mxu0 0.0
        %970 = vmatprep.subr.mxu0 0.0
        %971 = vmatpush1.xpose.msra.mxu0 0.0
        %972 = vmatprep.subr.mxu0 0.0
        %973 = vmatpush1.xpose.msra.mxu0 0.0
        %974 = vmatprep.subr.mxu0 0.0
        %975 = vmatpush1.xpose.msra.mxu0 0.0
        %976 = vmatprep.subr.mxu0 0.0
        %977 = vmatpush1.xpose.msra.mxu0 0.0
        %978 = vmatprep.subr.mxu0 0.0
        %979 = vmatpush1.xpose.msra.mxu0 0.0
        %980 = vmatprep.subr.mxu0 0.0
        %981 = vmatpush1.xpose.msra.mxu0 0.0
        %982 = vmatprep.subr.mxu0 0.0
        %983 = vmatpush1.xpose.msra.mxu0 0.0
        %984 = vmatprep.subr.mxu0 0.0
        %985 = vmatpush1.xpose.msra.mxu0 0.0
        %986 = vmatprep.subr.mxu0 0.0
        %987 = vmatpush1.xpose.msra.mxu0 0.0
        %988 = vmatprep.subr.mxu0 0.0
        %989 = vmatpush1.xpose.msra.mxu0 0.0
        %990 = vmatprep.subr.mxu0 0.0
        %991 = vmatpush1.xpose.msra.mxu0 0.0
        %992 = vmatprep.subr.mxu0 0.0
        %993 = vmatpush1.xpose.msra.mxu0 0.0
        %994 = vmatprep.subr.mxu0 0.0
        %995 = vmatpush1.xpose.msra.mxu0 0.0
        %996 = vmatprep.subr.mxu0 0.0
        %997 = vmatpush1.xpose.msra.mxu0 0.0
        %998 = vmatprep.mubr.f32.mxu0 0.0
        %999 = vmatmul.mubr.f32.gmra.mrb[0].mxu0 %v930
        %v1000 = vpop.f32.mrb[0].mxu0
        %v1001 = vadd.f32 0.0, %v1000
        %v1002 = vpop.f32.mrb[0].mxu0
        %1003 = vdwg.mxu0
        %v1004 = vmul.f32 %v469, 0.35355338
        %v1005 = vmul.f32 %v545, 0.35355338
        %v1006 = vmul.f32 %v621, 0.35355338
        %v1007 = vmul.f32 %v697, 0.35355338
        %v1008 = vmul.f32 %v773, 0.35355338
        %v1009 = vmul.f32 %v849, 0.35355338
        %v1010 = vmul.f32 %v925, 0.35355338
        %v1011 = vmul.f32 %v1001, 0.35355338
        %v1012 = vsel %vm397, %v1004, -inf
        %1013 = vmax.xlane.f32.xlu0 %v1012
        %v1014 = vpop.xlane.xlu0 %1013
        %v1015 = vsel %vm397, %v1005, -inf
        %1016 = vmax.xlane.f32.xlu0 %v1015
        %v1017 = vpop.xlane.xlu0 %1016
        %v1018 = vsel %vm397, %v1006, -inf
        %1019 = vmax.xlane.f32.xlu0 %v1018
        %v1020 = vpop.xlane.xlu0 %1019
        %v1021 = vsel %vm397, %v1007, -inf
        %1022 = vmax.xlane.f32.xlu0 %v1021
        %v1023 = vpop.xlane.xlu0 %1022
        %v1024 = vsel %vm397, %v1008, -inf
        %1025 = vmax.xlane.f32.xlu0 %v1024
        %v1026 = vpop.xlane.xlu0 %1025
        %v1027 = vsel %vm397, %v1009, -inf
        %1028 = vmax.xlane.f32.xlu0 %v1027
        %v1029 = vpop.xlane.xlu0 %1028
        %v1030 = vsel %vm397, %v1010, -inf
        %1031 = vmax.xlane.f32.xlu0 %v1030
        %v1032 = vpop.xlane.xlu0 %1031
        %v1033 = vsel %vm397, %v1011, -inf
        %1034 = vmax.xlane.f32.xlu0 %v1033
        %v1035 = vpop.xlane.xlu0 %1034
        %v1036 = vsub.f32 %v1004, %v1014
        %v1037 = vsub.f32 %v1005, %v1017
        %v1038 = vsub.f32 %v1006, %v1020
        %v1039 = vsub.f32 %v1007, %v1023
        %v1040 = vsub.f32 %v1008, %v1026
        %v1041 = vsub.f32 %v1009, %v1029
        %v1042 = vsub.f32 %v1010, %v1032
        %v1043 = vsub.f32 %v1011, %v1035
        %v1044 = vmul.f32 %v1036, 1.442695
        %v1045 = vpow.pop %v1044
        %v1046 = vmul.f32 %v1037, 1.442695
        %v1047 = vpow.pop %v1046
        %v1048 = vmul.f32 %v1038, 1.442695
        %v1049 = vpow.pop %v1048
        %v1050 = vmul.f32 %v1039, 1.442695
        %v1051 = vpow.pop %v1050
        %v1052 = vmul.f32 %v1040, 1.442695
        %v1053 = vpow.pop %v1052
        %v1054 = vmul.f32 %v1041, 1.442695
        %v1055 = vpow.pop %v1054
        %v1056 = vmul.f32 %v1042, 1.442695
        %v1057 = vpow.pop %v1056
        %v1058 = vmul.f32 %v1043, 1.442695
        %v1059 = vpow.pop %v1058
        %v1060 = vsel %vm397, %v1045, 0.0
        %1061 = vadd.xlane.f32.xlu0 %v1060
        %v1062 = vpop.xlane.xlu0 %1061
        %v1063 = vsel %vm397, %v1047, 0.0
        %1064 = vadd.xlane.f32.xlu0 %v1063
        %v1065 = vpop.xlane.xlu0 %1064
        %v1066 = vsel %vm397, %v1049, 0.0
        %1067 = vadd.xlane.f32.xlu0 %v1066
        %v1068 = vpop.xlane.xlu0 %1067
        %v1069 = vsel %vm397, %v1051, 0.0
        %1070 = vadd.xlane.f32.xlu0 %v1069
        %v1071 = vpop.xlane.xlu0 %1070
        %v1072 = vsel %vm397, %v1053, 0.0
        %1073 = vadd.xlane.f32.xlu0 %v1072
        %v1074 = vpop.xlane.xlu0 %1073
        %v1075 = vsel %vm397, %v1055, 0.0
        %1076 = vadd.xlane.f32.xlu0 %v1075
        %v1077 = vpop.xlane.xlu0 %1076
        %v1078 = vsel %vm397, %v1057, 0.0
        %1079 = vadd.xlane.f32.xlu0 %v1078
        %v1080 = vpop.xlane.xlu0 %1079
        %v1081 = vsel %vm397, %v1059, 0.0
        %1082 = vadd.xlane.f32.xlu0 %v1081
        %v1083 = vpop.xlane.xlu0 %1082
        %v1084 = vrcp.pop %v1062
        %v1085 = vrcp.pop %v1065
        %v1086 = vrcp.pop %v1068
        %v1087 = vrcp.pop %v1071
        %v1088 = vrcp.pop %v1074
        %v1089 = vrcp.pop %v1077
        %v1090 = vrcp.pop %v1080
        %v1091 = vrcp.pop %v1083
        %v1092 = vmul.f32 %v1045, %v1084
        %v1093 = vmul.f32 %v1047, %v1085
        %v1094 = vmul.f32 %v1049, %v1086
        %v1095 = vmul.f32 %v1051, %v1087
        %v1096 = vmul.f32 %v1053, %v1088
        %v1097 = vmul.f32 %v1055, %v1089
        %v1098 = vmul.f32 %v1057, %v1090
        %v1099 = vmul.f32 %v1059, %v1091
        %1100 = vrot.lane.b32.xlu0 %v373, 64
        %v1101 = vpop.permute.xlu0 %1100
        %v1104 = vsel %vm397, %v1092, 0
        %1106 = vmatprep.subr.mxu0 0.0
        %1107 = vmatpush1.msra.mxu0 %v1101
        %1108 = vmatprep.subr.mxu0 0.0
        %1109 = vmatpush1.msra.mxu0 0.0
        %1110 = vmatprep.subr.mxu0 0.0
        %1111 = vmatpush1.msra.mxu0 0.0
        %1112 = vmatprep.subr.mxu0 0.0
        %1113 = vmatpush1.msra.mxu0 0.0
        %1114 = vmatprep.subr.mxu0 0.0
        %1115 = vmatpush1.msra.mxu0 0.0
        %1116 = vmatprep.subr.mxu0 0.0
        %1117 = vmatpush1.msra.mxu0 0.0
        %1118 = vmatprep.subr.mxu0 0.0
        %1119 = vmatpush1.msra.mxu0 0.0
        %1120 = vmatprep.subr.mxu0 0.0
        %1121 = vmatpush1.msra.mxu0 0.0
        %1122 = vmatprep.subr.mxu0 0.0
        %1123 = vmatpush1.msra.mxu0 0.0
        %1124 = vmatprep.subr.mxu0 0.0
        %1125 = vmatpush1.msra.mxu0 0.0
        %1126 = vmatprep.subr.mxu0 0.0
        %1127 = vmatpush1.msra.mxu0 0.0
        %1128 = vmatprep.subr.mxu0 0.0
        %1129 = vmatpush1.msra.mxu0 0.0
        %1130 = vmatprep.subr.mxu0 0.0
        %1131 = vmatpush1.msra.mxu0 0.0
        %1132 = vmatprep.subr.mxu0 0.0
        %1133 = vmatpush1.msra.mxu0 0.0
        %1134 = vmatprep.subr.mxu0 0.0
        %1135 = vmatpush1.msra.mxu0 0.0
        %1136 = vmatprep.subr.mxu0 0.0
        %1137 = vmatpush1.msra.mxu0 0.0
        %1138 = vmatprep.subr.mxu0 0.0
        %1139 = vmatpush1.msra.mxu0 0.0
        %1140 = vmatprep.subr.mxu0 0.0
        %1141 = vmatpush1.msra.mxu0 0.0
        %1142 = vmatprep.subr.mxu0 0.0
        %1143 = vmatpush1.msra.mxu0 0.0
        %1144 = vmatprep.subr.mxu0 0.0
        %1145 = vmatpush1.msra.mxu0 0.0
        %1146 = vmatprep.subr.mxu0 0.0
        %1147 = vmatpush1.msra.mxu0 0.0
        %1148 = vmatprep.subr.mxu0 0.0
        %1149 = vmatpush1.msra.mxu0 0.0
        %1150 = vmatprep.subr.mxu0 0.0
        %1151 = vmatpush1.msra.mxu0 0.0
        %1152 = vmatprep.subr.mxu0 0.0
        %1153 = vmatpush1.msra.mxu0 0.0
        %1154 = vmatprep.subr.mxu0 0.0
        %1155 = vmatpush1.msra.mxu0 0.0
        %1156 = vmatprep.subr.mxu0 0.0
        %1157 = vmatpush1.msra.mxu0 0.0
        %1158 = vmatprep.subr.mxu0 0.0
        %1159 = vmatpush1.msra.mxu0 0.0
        %1160 = vmatprep.subr.mxu0 0.0
        %1161 = vmatpush1.msra.mxu0 0.0
        %1162 = vmatprep.subr.mxu0 0.0
        %1163 = vmatpush1.msra.mxu0 0.0
        %1164 = vmatprep.subr.mxu0 0.0
        %1165 = vmatpush1.msra.mxu0 0.0
        %1166 = vmatprep.subr.mxu0 0.0
        %1167 = vmatpush1.msra.mxu0 0.0
        %1168 = vmatprep.subr.mxu0 0.0
        %1169 = vmatpush1.msra.mxu0 0.0
        %1170 = vmatprep.mubr.f32.mxu0 0.0
        %1171 = vmatmul.mubr.f32.gmra.mrb[0].mxu0 %v1104
        %v1172 = vpop.f32.mrb[0].mxu0
        %v1173 = vadd.f32 0.0, %v1172
        %v1174 = vpop.f32.mrb[0].mxu0
        %1175 = vdwg.mxu0
        %1176 = vrot.lane.b32.xlu0 %v378, 64
        %v1177 = vpop.permute.xlu0 %1176
        %v1180 = vsel %vm397, %v1093, 0
        %1182 = vmatprep.subr.mxu0 0.0
        %1183 = vmatpush1.msra.mxu0 %v1177
        %1184 = vmatprep.subr.mxu0 0.0
        %1185 = vmatpush1.msra.mxu0 0.0
        %1186 = vmatprep.subr.mxu0 0.0
        %1187 = vmatpush1.msra.mxu0 0.0
        %1188 = vmatprep.subr.mxu0 0.0
        %1189 = vmatpush1.msra.mxu0 0.0
        %1190 = vmatprep.subr.mxu0 0.0
        %1191 = vmatpush1.msra.mxu0 0.0
        %1192 = vmatprep.subr.mxu0 0.0
        %1193 = vmatpush1.msra.mxu0 0.0
        %1194 = vmatprep.subr.mxu0 0.0
        %1195 = vmatpush1.msra.mxu0 0.0
        %1196 = vmatprep.subr.mxu0 0.0
        %1197 = vmatpush1.msra.mxu0 0.0
        %1198 = vmatprep.subr.mxu0 0.0
        %1199 = vmatpush1.msra.mxu0 0.0
        %1200 = vmatprep.subr.mxu0 0.0
        %1201 = vmatpush1.msra.mxu0 0.0
        %1202 = vmatprep.subr.mxu0 0.0
        %1203 = vmatpush1.msra.mxu0 0.0
        %1204 = vmatprep.subr.mxu0 0.0
        %1205 = vmatpush1.msra.mxu0 0.0
        %1206 = vmatprep.subr.mxu0 0.0
        %1207 = vmatpush1.msra.mxu0 0.0
        %1208 = vmatprep.subr.mxu0 0.0
        %1209 = vmatpush1.msra.mxu0 0.0
        %1210 = vmatprep.subr.mxu0 0.0
        %1211 = vmatpush1.msra.mxu0 0.0
        %1212 = vmatprep.subr.mxu0 0.0
        %1213 = vmatpush1.msra.mxu0 0.0
        %1214 = vmatprep.subr.mxu0 0.0
        %1215 = vmatpush1.msra.mxu0 0.0
        %1216 = vmatprep.subr.mxu0 0.0
        %1217 = vmatpush1.msra.mxu0 0.0
        %1218 = vmatprep.subr.mxu0 0.0
        %1219 = vmatpush1.msra.mxu0 0.0
        %1220 = vmatprep.subr.mxu0 0.0
        %1221 = vmatpush1.msra.mxu0 0.0
        %1222 = vmatprep.subr.mxu0 0.0
        %1223 = vmatpush1.msra.mxu0 0.0
        %1224 = vmatprep.subr.mxu0 0.0
        %1225 = vmatpush1.msra.mxu0 0.0
        %1226 = vmatprep.subr.mxu0 0.0
        %1227 = vmatpush1.msra.mxu0 0.0
        %1228 = vmatprep.subr.mxu0 0.0
        %1229 = vmatpush1.msra.mxu0 0.0
        %1230 = vmatprep.subr.mxu0 0.0
        %1231 = vmatpush1.msra.mxu0 0.0
        %1232 = vmatprep.subr.mxu0 0.0
        %1233 = vmatpush1.msra.mxu0 0.0
        %1234 = vmatprep.subr.mxu0 0.0
        %1235 = vmatpush1.msra.mxu0 0.0
        %1236 = vmatprep.subr.mxu0 0.0
        %1237 = vmatpush1.msra.mxu0 0.0
        %1238 = vmatprep.subr.mxu0 0.0
        %1239 = vmatpush1.msra.mxu0 0.0
        %1240 = vmatprep.subr.mxu0 0.0
        %1241 = vmatpush1.msra.mxu0 0.0
        %1242 = vmatprep.subr.mxu0 0.0
        %1243 = vmatpush1.msra.mxu0 0.0
        %1244 = vmatprep.subr.mxu0 0.0
        %1245 = vmatpush1.msra.mxu0 0.0
        %1246 = vmatprep.mubr.f32.mxu0 0.0
        %1247 = vmatmul.mubr.f32.gmra.mrb[0].mxu0 %v1180
        %v1248 = vpop.f32.mrb[0].mxu0
        %v1249 = vadd.f32 0.0, %v1248
        %v1250 = vpop.f32.mrb[0].mxu0
        %1251 = vdwg.mxu0
        %1252 = vrot.lane.b32.xlu0 %v384, 64
        %v1253 = vpop.permute.xlu0 %1252
        %v1256 = vsel %vm397, %v1094, 0
        %1258 = vmatprep.subr.mxu0 0.0
        %1259 = vmatpush1.msra.mxu0 %v1253
        %1260 = vmatprep.subr.mxu0 0.0
        %1261 = vmatpush1.msra.mxu0 0.0
        %1262 = vmatprep.subr.mxu0 0.0
        %1263 = vmatpush1.msra.mxu0 0.0
        %1264 = vmatprep.subr.mxu0 0.0
        %1265 = vmatpush1.msra.mxu0 0.0
        %1266 = vmatprep.subr.mxu0 0.0
        %1267 = vmatpush1.msra.mxu0 0.0
        %1268 = vmatprep.subr.mxu0 0.0
        %1269 = vmatpush1.msra.mxu0 0.0
        %1270 = vmatprep.subr.mxu0 0.0
        %1271 = vmatpush1.msra.mxu0 0.0
        %1272 = vmatprep.subr.mxu0 0.0
        %1273 = vmatpush1.msra.mxu0 0.0
        %1274 = vmatprep.subr.mxu0 0.0
        %1275 = vmatpush1.msra.mxu0 0.0
        %1276 = vmatprep.subr.mxu0 0.0
        %1277 = vmatpush1.msra.mxu0 0.0
        %1278 = vmatprep.subr.mxu0 0.0
        %1279 = vmatpush1.msra.mxu0 0.0
        %1280 = vmatprep.subr.mxu0 0.0
        %1281 = vmatpush1.msra.mxu0 0.0
        %1282 = vmatprep.subr.mxu0 0.0
        %1283 = vmatpush1.msra.mxu0 0.0
        %1284 = vmatprep.subr.mxu0 0.0
        %1285 = vmatpush1.msra.mxu0 0.0
        %1286 = vmatprep.subr.mxu0 0.0
        %1287 = vmatpush1.msra.mxu0 0.0
        %1288 = vmatprep.subr.mxu0 0.0
        %1289 = vmatpush1.msra.mxu0 0.0
        %1290 = vmatprep.subr.mxu0 0.0
        %1291 = vmatpush1.msra.mxu0 0.0
        %1292 = vmatprep.subr.mxu0 0.0
        %1293 = vmatpush1.msra.mxu0 0.0
        %1294 = vmatprep.subr.mxu0 0.0
        %1295 = vmatpush1.msra.mxu0 0.0
        %1296 = vmatprep.subr.mxu0 0.0
        %1297 = vmatpush1.msra.mxu0 0.0
        %1298 = vmatprep.subr.mxu0 0.0
        %1299 = vmatpush1.msra.mxu0 0.0
        %1300 = vmatprep.subr.mxu0 0.0
        %1301 = vmatpush1.msra.mxu0 0.0
        %1302 = vmatprep.subr.mxu0 0.0
        %1303 = vmatpush1.msra.mxu0 0.0
        %1304 = vmatprep.subr.mxu0 0.0
        %1305 = vmatpush1.msra.mxu0 0.0
        %1306 = vmatprep.subr.mxu0 0.0
        %1307 = vmatpush1.msra.mxu0 0.0
        %1308 = vmatprep.subr.mxu0 0.0
        %1309 = vmatpush1.msra.mxu0 0.0
        %1310 = vmatprep.subr.mxu0 0.0
        %1311 = vmatpush1.msra.mxu0 0.0
        %1312 = vmatprep.subr.mxu0 0.0
        %1313 = vmatpush1.msra.mxu0 0.0
        %1314 = vmatprep.subr.mxu0 0.0
        %1315 = vmatpush1.msra.mxu0 0.0
        %1316 = vmatprep.subr.mxu0 0.0
        %1317 = vmatpush1.msra.mxu0 0.0
        %1318 = vmatprep.subr.mxu0 0.0
        %1319 = vmatpush1.msra.mxu0 0.0
        %1320 = vmatprep.subr.mxu0 0.0
        %1321 = vmatpush1.msra.mxu0 0.0
        %1322 = vmatprep.mubr.f32.mxu0 0.0
        %1323 = vmatmul.mubr.f32.gmra.mrb[0].mxu0 %v1256
        %v1324 = vpop.f32.mrb[0].mxu0
        %v1325 = vadd.f32 0.0, %v1324
        %v1326 = vpop.f32.mrb[0].mxu0
        %1327 = vdwg.mxu0
        %1328 = vrot.lane.b32.xlu0 %v386, 64
        %v1329 = vpop.permute.xlu0 %1328
        %v1332 = vsel %vm397, %v1095, 0
        %1334 = vmatprep.subr.mxu0 0.0
        %1335 = vmatpush1.msra.mxu0 %v1329
        %1336 = vmatprep.subr.mxu0 0.0
        %1337 = vmatpush1.msra.mxu0 0.0
        %1338 = vmatprep.subr.mxu0 0.0
        %1339 = vmatpush1.msra.mxu0 0.0
        %1340 = vmatprep.subr.mxu0 0.0
        %1341 = vmatpush1.msra.mxu0 0.0
        %1342 = vmatprep.subr.mxu0 0.0
        %1343 = vmatpush1.msra.mxu0 0.0
        %1344 = vmatprep.subr.mxu0 0.0
        %1345 = vmatpush1.msra.mxu0 0.0
        %1346 = vmatprep.subr.mxu0 0.0
        %1347 = vmatpush1.msra.mxu0 0.0
        %1348 = vmatprep.subr.mxu0 0.0
        %1349 = vmatpush1.msra.mxu0 0.0
        %1350 = vmatprep.subr.mxu0 0.0
        %1351 = vmatpush1.msra.mxu0 0.0
        %1352 = vmatprep.subr.mxu0 0.0
        %1353 = vmatpush1.msra.mxu0 0.0
        %1354 = vmatprep.subr.mxu0 0.0
        %1355 = vmatpush1.msra.mxu0 0.0
        %1356 = vmatprep.subr.mxu0 0.0
        %1357 = vmatpush1.msra.mxu0 0.0
        %1358 = vmatprep.subr.mxu0 0.0
        %1359 = vmatpush1.msra.mxu0 0.0
        %1360 = vmatprep.subr.mxu0 0.0
        %1361 = vmatpush1.msra.mxu0 0.0
        %1362 = vmatprep.subr.mxu0 0.0
        %1363 = vmatpush1.msra.mxu0 0.0
        %1364 = vmatprep.subr.mxu0 0.0
        %1365 = vmatpush1.msra.mxu0 0.0
        %1366 = vmatprep.subr.mxu0 0.0
        %1367 = vmatpush1.msra.mxu0 0.0
        %1368 = vmatprep.subr.mxu0 0.0
        %1369 = vmatpush1.msra.mxu0 0.0
        %1370 = vmatprep.subr.mxu0 0.0
        %1371 = vmatpush1.msra.mxu0 0.0
        %1372 = vmatprep.subr.mxu0 0.0
        %1373 = vmatpush1.msra.mxu0 0.0
        %1374 = vmatprep.subr.mxu0 0.0
        %1375 = vmatpush1.msra.mxu0 0.0
        %1376 = vmatprep.subr.mxu0 0.0
        %1377 = vmatpush1.msra.mxu0 0.0
        %1378 = vmatprep.subr.mxu0 0.0
        %1379 = vmatpush1.msra.mxu0 0.0
        %1380 = vmatprep.subr.mxu0 0.0
        %1381 = vmatpush1.msra.mxu0 0.0
        %1382 = vmatprep.subr.mxu0 0.0
        %1383 = vmatpush1.msra.mxu0 0.0
        %1384 = vmatprep.subr.mxu0 0.0
        %1385 = vmatpush1.msra.mxu0 0.0
        %1386 = vmatprep.subr.mxu0 0.0
        %1387 = vmatpush1.msra.mxu0 0.0
        %1388 = vmatprep.subr.mxu0 0.0
        %1389 = vmatpush1.msra.mxu0 0.0
        %1390 = vmatprep.subr.mxu0 0.0
        %1391 = vmatpush1.msra.mxu0 0.0
        %1392 = vmatprep.subr.mxu0 0.0
        %1393 = vmatpush1.msra.mxu0 0.0
        %1394 = vmatprep.subr.mxu0 0.0
        %1395 = vmatpush1.msra.mxu0 0.0
        %1396 = vmatprep.subr.mxu0 0.0
        %1397 = vmatpush1.msra.mxu0 0.0
        %1398 = vmatprep.mubr.f32.mxu0 0.0
        %1399 = vmatmul.mubr.f32.gmra.mrb[0].mxu0 %v1332
        %v1400 = vpop.f32.mrb[0].mxu0
        %v1401 = vadd.f32 0.0, %v1400
        %v1402 = vpop.f32.mrb[0].mxu0
        %1403 = vdwg.mxu0
        %1404 = vrot.lane.b32.xlu0 %v388, 64
        %v1405 = vpop.permute.xlu0 %1404
        %v1408 = vsel %vm397, %v1096, 0
        %1410 = vmatprep.subr.mxu0 0.0
        %1411 = vmatpush1.msra.mxu0 %v1405
        %1412 = vmatprep.subr.mxu0 0.0
        %1413 = vmatpush1.msra.mxu0 0.0
        %1414 = vmatprep.subr.mxu0 0.0
        %1415 = vmatpush1.msra.mxu0 0.0
        %1416 = vmatprep.subr.mxu0 0.0
        %1417 = vmatpush1.msra.mxu0 0.0
        %1418 = vmatprep.subr.mxu0 0.0
        %1419 = vmatpush1.msra.mxu0 0.0
        %1420 = vmatprep.subr.mxu0 0.0
        %1421 = vmatpush1.msra.mxu0 0.0
        %1422 = vmatprep.subr.mxu0 0.0
        %1423 = vmatpush1.msra.mxu0 0.0
        %1424 = vmatprep.subr.mxu0 0.0
        %1425 = vmatpush1.msra.mxu0 0.0
        %1426 = vmatprep.subr.mxu0 0.0
        %1427 = vmatpush1.msra.mxu0 0.0
        %1428 = vmatprep.subr.mxu0 0.0
        %1429 = vmatpush1.msra.mxu0 0.0
        %1430 = vmatprep.subr.mxu0 0.0
        %1431 = vmatpush1.msra.mxu0 0.0
        %1432 = vmatprep.subr.mxu0 0.0
        %1433 = vmatpush1.msra.mxu0 0.0
        %1434 = vmatprep.subr.mxu0 0.0
        %1435 = vmatpush1.msra.mxu0 0.0
        %1436 = vmatprep.subr.mxu0 0.0
        %1437 = vmatpush1.msra.mxu0 0.0
        %1438 = vmatprep.subr.mxu0 0.0
        %1439 = vmatpush1.msra.mxu0 0.0
        %1440 = vmatprep.subr.mxu0 0.0
        %1441 = vmatpush1.msra.mxu0 0.0
        %1442 = vmatprep.subr.mxu0 0.0
        %1443 = vmatpush1.msra.mxu0 0.0
        %1444 = vmatprep.subr.mxu0 0.0
        %1445 = vmatpush1.msra.mxu0 0.0
        %1446 = vmatprep.subr.mxu0 0.0
        %1447 = vmatpush1.msra.mxu0 0.0
        %1448 = vmatprep.subr.mxu0 0.0
        %1449 = vmatpush1.msra.mxu0 0.0
        %1450 = vmatprep.subr.mxu0 0.0
        %1451 = vmatpush1.msra.mxu0 0.0
        %1452 = vmatprep.subr.mxu0 0.0
        %1453 = vmatpush1.msra.mxu0 0.0
        %1454 = vmatprep.subr.mxu0 0.0
        %1455 = vmatpush1.msra.mxu0 0.0
        %1456 = vmatprep.subr.mxu0 0.0
        %1457 = vmatpush1.msra.mxu0 0.0
        %1458 = vmatprep.subr.mxu0 0.0
        %1459 = vmatpush1.msra.mxu0 0.0
        %1460 = vmatprep.subr.mxu0 0.0
        %1461 = vmatpush1.msra.mxu0 0.0
        %1462 = vmatprep.subr.mxu0 0.0
        %1463 = vmatpush1.msra.mxu0 0.0
        %1464 = vmatprep.subr.mxu0 0.0
        %1465 = vmatpush1.msra.mxu0 0.0
        %1466 = vmatprep.subr.mxu0 0.0
        %1467 = vmatpush1.msra.mxu0 0.0
        %1468 = vmatprep.subr.mxu0 0.0
        %1469 = vmatpush1.msra.mxu0 0.0
        %1470 = vmatprep.subr.mxu0 0.0
        %1471 = vmatpush1.msra.mxu0 0.0
        %1472 = vmatprep.subr.mxu0 0.0
        %1473 = vmatpush1.msra.mxu0 0.0
        %1474 = vmatprep.mubr.f32.mxu0 0.0
        %1475 = vmatmul.mubr.f32.gmra.mrb[0].mxu0 %v1408
        %v1476 = vpop.f32.mrb[0].mxu0
        %v1477 = vadd.f32 0.0, %v1476
        %v1478 = vpop.f32.mrb[0].mxu0
        %1479 = vdwg.mxu0
        %1480 = vrot.lane.b32.xlu0 %v390, 64
        %v1481 = vpop.permute.xlu0 %1480
        %v1484 = vsel %vm397, %v1097, 0
        %1486 = vmatprep.subr.mxu0 0.0
        %1487 = vmatpush1.msra.mxu0 %v1481
        %1488 = vmatprep.subr.mxu0 0.0
        %1489 = vmatpush1.msra.mxu0 0.0
        %1490 = vmatprep.subr.mxu0 0.0
        %1491 = vmatpush1.msra.mxu0 0.0
        %1492 = vmatprep.subr.mxu0 0.0
        %1493 = vmatpush1.msra.mxu0 0.0
        %1494 = vmatprep.subr.mxu0 0.0
        %1495 = vmatpush1.msra.mxu0 0.0
        %1496 = vmatprep.subr.mxu0 0.0
        %1497 = vmatpush1.msra.mxu0 0.0
        %1498 = vmatprep.subr.mxu0 0.0
        %1499 = vmatpush1.msra.mxu0 0.0
        %1500 = vmatprep.subr.mxu0 0.0
        %1501 = vmatpush1.msra.mxu0 0.0
        %1502 = vmatprep.subr.mxu0 0.0
        %1503 = vmatpush1.msra.mxu0 0.0
        %1504 = vmatprep.subr.mxu0 0.0
        %1505 = vmatpush1.msra.mxu0 0.0
        %1506 = vmatprep.subr.mxu0 0.0
        %1507 = vmatpush1.msra.mxu0 0.0
        %1508 = vmatprep.subr.mxu0 0.0
        %1509 = vmatpush1.msra.mxu0 0.0
        %1510 = vmatprep.subr.mxu0 0.0
        %1511 = vmatpush1.msra.mxu0 0.0
        %1512 = vmatprep.subr.mxu0 0.0
        %1513 = vmatpush1.msra.mxu0 0.0
        %1514 = vmatprep.subr.mxu0 0.0
        %1515 = vmatpush1.msra.mxu0 0.0
        %1516 = vmatprep.subr.mxu0 0.0
        %1517 = vmatpush1.msra.mxu0 0.0
        %1518 = vmatprep.subr.mxu0 0.0
        %1519 = vmatpush1.msra.mxu0 0.0
        %1520 = vmatprep.subr.mxu0 0.0
        %1521 = vmatpush1.msra.mxu0 0.0
        %1522 = vmatprep.subr.mxu0 0.0
        %1523 = vmatpush1.msra.mxu0 0.0
        %1524 = vmatprep.subr.mxu0 0.0
        %1525 = vmatpush1.msra.mxu0 0.0
        %1526 = vmatprep.subr.mxu0 0.0
        %1527 = vmatpush1.msra.mxu0 0.0
        %1528 = vmatprep.subr.mxu0 0.0
        %1529 = vmatpush1.msra.mxu0 0.0
        %1530 = vmatprep.subr.mxu0 0.0
        %1531 = vmatpush1.msra.mxu0 0.0
        %1532 = vmatprep.subr.mxu0 0.0
        %1533 = vmatpush1.msra.mxu0 0.0
        %1534 = vmatprep.subr.mxu0 0.0
        %1535 = vmatpush1.msra.mxu0 0.0
        %1536 = vmatprep.subr.mxu0 0.0
        %1537 = vmatpush1.msra.mxu0 0.0
        %1538 = vmatprep.subr.mxu0 0.0
        %1539 = vmatpush1.msra.mxu0 0.0
        %1540 = vmatprep.subr.mxu0 0.0
        %1541 = vmatpush1.msra.mxu0 0.0
        %1542 = vmatprep.subr.mxu0 0.0
        %1543 = vmatpush1.msra.mxu0 0.0
        %1544 = vmatprep.subr.mxu0 0.0
        %1545 = vmatpush1.msra.mxu0 0.0
        %1546 = vmatprep.subr.mxu0 0.0
        %1547 = vmatpush1.msra.mxu0 0.0
        %1548 = vmatprep.subr.mxu0 0.0
        %1549 = vmatpush1.msra.mxu0 0.0
        %1550 = vmatprep.mubr.f32.mxu0 0.0
        %1551 = vmatmul.mubr.f32.gmra.mrb[0].mxu0 %v1484
        %v1552 = vpop.f32.mrb[0].mxu0
        %v1553 = vadd.f32 0.0, %v1552
        %v1554 = vpop.f32.mrb[0].mxu0
        %1555 = vdwg.mxu0
        %1556 = vrot.lane.b32.xlu0 %v392, 64
        %v1557 = vpop.permute.xlu0 %1556
        %v1560 = vsel %vm397, %v1098, 0
        %1562 = vmatprep.subr.mxu0 0.0
        %1563 = vmatpush1.msra.mxu0 %v1557
        %1564 = vmatprep.subr.mxu0 0.0
        %1565 = vmatpush1.msra.mxu0 0.0
        %1566 = vmatprep.subr.mxu0 0.0
        %1567 = vmatpush1.msra.mxu0 0.0
        %1568 = vmatprep.subr.mxu0 0.0
        %1569 = vmatpush1.msra.mxu0 0.0
        %1570 = vmatprep.subr.mxu0 0.0
        %1571 = vmatpush1.msra.mxu0 0.0
        %1572 = vmatprep.subr.mxu0 0.0
        %1573 = vmatpush1.msra.mxu0 0.0
        %1574 = vmatprep.subr.mxu0 0.0
        %1575 = vmatpush1.msra.mxu0 0.0
        %1576 = vmatprep.subr.mxu0 0.0
        %1577 = vmatpush1.msra.mxu0 0.0
        %1578 = vmatprep.subr.mxu0 0.0
        %1579 = vmatpush1.msra.mxu0 0.0
        %1580 = vmatprep.subr.mxu0 0.0
        %1581 = vmatpush1.msra.mxu0 0.0
        %1582 = vmatprep.subr.mxu0 0.0
        %1583 = vmatpush1.msra.mxu0 0.0
        %1584 = vmatprep.subr.mxu0 0.0
        %1585 = vmatpush1.msra.mxu0 0.0
        %1586 = vmatprep.subr.mxu0 0.0
        %1587 = vmatpush1.msra.mxu0 0.0
        %1588 = vmatprep.subr.mxu0 0.0
        %1589 = vmatpush1.msra.mxu0 0.0
        %1590 = vmatprep.subr.mxu0 0.0
        %1591 = vmatpush1.msra.mxu0 0.0
        %1592 = vmatprep.subr.mxu0 0.0
        %1593 = vmatpush1.msra.mxu0 0.0
        %1594 = vmatprep.subr.mxu0 0.0
        %1595 = vmatpush1.msra.mxu0 0.0
        %1596 = vmatprep.subr.mxu0 0.0
        %1597 = vmatpush1.msra.mxu0 0.0
        %1598 = vmatprep.subr.mxu0 0.0
        %1599 = vmatpush1.msra.mxu0 0.0
        %1600 = vmatprep.subr.mxu0 0.0
        %1601 = vmatpush1.msra.mxu0 0.0
        %1602 = vmatprep.subr.mxu0 0.0
        %1603 = vmatpush1.msra.mxu0 0.0
        %1604 = vmatprep.subr.mxu0 0.0
        %1605 = vmatpush1.msra.mxu0 0.0
        %1606 = vmatprep.subr.mxu0 0.0
        %1607 = vmatpush1.msra.mxu0 0.0
        %1608 = vmatprep.subr.mxu0 0.0
        %1609 = vmatpush1.msra.mxu0 0.0
        %1610 = vmatprep.subr.mxu0 0.0
        %1611 = vmatpush1.msra.mxu0 0.0
        %1612 = vmatprep.subr.mxu0 0.0
        %1613 = vmatpush1.msra.mxu0 0.0
        %1614 = vmatprep.subr.mxu0 0.0
        %1615 = vmatpush1.msra.mxu0 0.0
        %1616 = vmatprep.subr.mxu0 0.0
        %1617 = vmatpush1.msra.mxu0 0.0
        %1618 = vmatprep.subr.mxu0 0.0
        %1619 = vmatpush1.msra.mxu0 0.0
        %1620 = vmatprep.subr.mxu0 0.0
        %1621 = vmatpush1.msra.mxu0 0.0
        %1622 = vmatprep.subr.mxu0 0.0
        %1623 = vmatpush1.msra.mxu0 0.0
        %1624 = vmatprep.subr.mxu0 0.0
        %1625 = vmatpush1.msra.mxu0 0.0
        %1626 = vmatprep.mubr.f32.mxu0 0.0
        %1627 = vmatmul.mubr.f32.gmra.mrb[0].mxu0 %v1560
        %v1628 = vpop.f32.mrb[0].mxu0
        %v1629 = vadd.f32 0.0, %v1628
        %v1630 = vpop.f32.mrb[0].mxu0
        %1631 = vdwg.mxu0
        %1632 = vrot.lane.b32.xlu0 %v394, 64
        %v1633 = vpop.permute.xlu0 %1632
        %v1636 = vsel %vm397, %v1099, 0
        %1638 = vmatprep.subr.mxu0 0.0
        %1639 = vmatpush1.msra.mxu0 %v1633
        %1640 = vmatprep.subr.mxu0 0.0
        %1641 = vmatpush1.msra.mxu0 0.0
        %1642 = vmatprep.subr.mxu0 0.0
        %1643 = vmatpush1.msra.mxu0 0.0
        %1644 = vmatprep.subr.mxu0 0.0
        %1645 = vmatpush1.msra.mxu0 0.0
        %1646 = vmatprep.subr.mxu0 0.0
        %1647 = vmatpush1.msra.mxu0 0.0
        %1648 = vmatprep.subr.mxu0 0.0
        %1649 = vmatpush1.msra.mxu0 0.0
        %1650 = vmatprep.subr.mxu0 0.0
        %1651 = vmatpush1.msra.mxu0 0.0
        %1652 = vmatprep.subr.mxu0 0.0
        %1653 = vmatpush1.msra.mxu0 0.0
        %1654 = vmatprep.subr.mxu0 0.0
        %1655 = vmatpush1.msra.mxu0 0.0
        %1656 = vmatprep.subr.mxu0 0.0
        %1657 = vmatpush1.msra.mxu0 0.0
        %1658 = vmatprep.subr.mxu0 0.0
        %1659 = vmatpush1.msra.mxu0 0.0
        %1660 = vmatprep.subr.mxu0 0.0
        %1661 = vmatpush1.msra.mxu0 0.0
        %1662 = vmatprep.subr.mxu0 0.0
        %1663 = vmatpush1.msra.mxu0 0.0
        %1664 = vmatprep.subr.mxu0 0.0
        %1665 = vmatpush1.msra.mxu0 0.0
        %1666 = vmatprep.subr.mxu0 0.0
        %1667 = vmatpush1.msra.mxu0 0.0
        %1668 = vmatprep.subr.mxu0 0.0
        %1669 = vmatpush1.msra.mxu0 0.0
        %1670 = vmatprep.subr.mxu0 0.0
        %1671 = vmatpush1.msra.mxu0 0.0
        %1672 = vmatprep.subr.mxu0 0.0
        %1673 = vmatpush1.msra.mxu0 0.0
        %1674 = vmatprep.subr.mxu0 0.0
        %1675 = vmatpush1.msra.mxu0 0.0
        %1676 = vmatprep.subr.mxu0 0.0
        %1677 = vmatpush1.msra.mxu0 0.0
        %1678 = vmatprep.subr.mxu0 0.0
        %1679 = vmatpush1.msra.mxu0 0.0
        %1680 = vmatprep.subr.mxu0 0.0
        %1681 = vmatpush1.msra.mxu0 0.0
        %1682 = vmatprep.subr.mxu0 0.0
        %1683 = vmatpush1.msra.mxu0 0.0
        %1684 = vmatprep.subr.mxu0 0.0
        %1685 = vmatpush1.msra.mxu0 0.0
        %1686 = vmatprep.subr.mxu0 0.0
        %1687 = vmatpush1.msra.mxu0 0.0
        %1688 = vmatprep.subr.mxu0 0.0
        %1689 = vmatpush1.msra.mxu0 0.0
        %1690 = vmatprep.subr.mxu0 0.0
        %1691 = vmatpush1.msra.mxu0 0.0
        %1692 = vmatprep.subr.mxu0 0.0
        %1693 = vmatpush1.msra.mxu0 0.0
        %1694 = vmatprep.subr.mxu0 0.0
        %1695 = vmatpush1.msra.mxu0 0.0
        %1696 = vmatprep.subr.mxu0 0.0
        %1697 = vmatpush1.msra.mxu0 0.0
        %1698 = vmatprep.subr.mxu0 0.0
        %1699 = vmatpush1.msra.mxu0 0.0
        %1700 = vmatprep.subr.mxu0 0.0
        %1701 = vmatpush1.msra.mxu0 0.0
        %1702 = vmatprep.mubr.f32.mxu0 0.0
        %1703 = vmatmul.mubr.f32.gmra.mrb[0].mxu0 %v1636
        %v1704 = vpop.f32.mrb[0].mxu0
        %v1705 = vadd.f32 0.0, %v1704
        %v1706 = vpop.f32.mrb[0].mxu0
        %1707 = vdwg.mxu0
        %1710 = vrot.lane.b32.xlu0 %v1325, 8
        %v1711 = vpop.permute.xlu0 %1710
        %1712 = vrot.lane.b32.xlu0 %v1401, 8
        %v1713 = vpop.permute.xlu0 %1712
        %1718 = vrot.lane.b32.xlu0 %v1477, 16
        %v1719 = vpop.permute.xlu0 %1718
        %1720 = vrot.lane.b32.xlu0 %v1553, 16
        %v1721 = vpop.permute.xlu0 %1720
        %1726 = vrot.lane.b32.xlu0 %v1629, 24
        %v1727 = vpop.permute.xlu0 %1726
        %1728 = vrot.lane.b32.xlu0 %v1705, 24
        %v1729 = vpop.permute.xlu0 %1728
        %v1732 = vsel %vm397, %v1173, %v1711
        %v1733 = vsel %vm397, %v1249, %v1713
        %vm1734 = vcmask 130048
        %v1735 = vsel %vm1734, %v1732, %v1719
        %v1736 = vsel %vm1734, %v1733, %v1721
        %vm1737 = vcmask 195584
        %v1738 = vsel %vm1737, %v1735, %v1727
        %v1739 = vsel %vm1737, %v1736, %v1729
        %v1740 = vlaneseq
        %v1741 = vshrl.u32 %v1740, 7
        %v1742 = vsub.s32 1, %v1741
        %v1743 = vrot.slane %v294, %v1742
        %v1745 = vsel %vm299, %v1738, 0
        %v1748 = vsel %vm299, %v1739, 0
        %1750 = vmatprep.subr.mxu0 0.0
        %1751 = vmatpush1.msra.mxu0 %v282
        %1752 = vmatprep.subr.mxu0 0.0
        %1753 = vmatpush1.msra.mxu0 %v283
        %1754 = vmatprep.subr.mxu0 0.0
        %1755 = vmatpush1.msra.mxu0 %v284
        %1756 = vmatprep.subr.mxu0 0.0
        %1757 = vmatpush1.msra.mxu0 %v285
        %1758 = vmatprep.subr.mxu0 0.0
        %1759 = vmatpush1.msra.mxu0 0.0
        %1760 = vmatprep.subr.mxu0 0.0
        %1761 = vmatpush1.msra.mxu0 0.0
        %1762 = vmatprep.subr.mxu0 0.0
        %1763 = vmatpush1.msra.mxu0 0.0
        %1764 = vmatprep.subr.mxu0 0.0
        %1765 = vmatpush1.msra.mxu0 0.0
        %1766 = vmatprep.subr.mxu0 0.0
        %1767 = vmatpush1.msra.mxu0 0.0
        %1768 = vmatprep.subr.mxu0 0.0
        %1769 = vmatpush1.msra.mxu0 0.0
        %1770 = vmatprep.subr.mxu0 0.0
        %1771 = vmatpush1.msra.mxu0 0.0
        %1772 = vmatprep.subr.mxu0 0.0
        %1773 = vmatpush1.msra.mxu0 0.0
        %1774 = vmatprep.subr.mxu0 0.0
        %1775 = vmatpush1.msra.mxu0 0.0
        %1776 = vmatprep.subr.mxu0 0.0
        %1777 = vmatpush1.msra.mxu0 0.0
        %1778 = vmatprep.subr.mxu0 0.0
        %1779 = vmatpush1.msra.mxu0 0.0
        %1780 = vmatprep.subr.mxu0 0.0
        %1781 = vmatpush1.msra.mxu0 0.0
        %1782 = vmatprep.subr.mxu0 0.0
        %1783 = vmatpush1.msra.mxu0 0.0
        %1784 = vmatprep.subr.mxu0 0.0
        %1785 = vmatpush1.msra.mxu0 0.0
        %1786 = vmatprep.subr.mxu0 0.0
        %1787 = vmatpush1.msra.mxu0 0.0
        %1788 = vmatprep.subr.mxu0 0.0
        %1789 = vmatpush1.msra.mxu0 0.0
        %1790 = vmatprep.subr.mxu0 0.0
        %1791 = vmatpush1.msra.mxu0 0.0
        %1792 = vmatprep.subr.mxu0 0.0
        %1793 = vmatpush1.msra.mxu0 0.0
        %1794 = vmatprep.subr.mxu0 0.0
        %1795 = vmatpush1.msra.mxu0 0.0
        %1796 = vmatprep.subr.mxu0 0.0
        %1797 = vmatpush1.msra.mxu0 0.0
        %1798 = vmatprep.subr.mxu0 0.0
        %1799 = vmatpush1.msra.mxu0 0.0
        %1800 = vmatprep.subr.mxu0 0.0
        %1801 = vmatpush1.msra.mxu0 0.0
        %1802 = vmatprep.subr.mxu0 0.0
        %1803 = vmatpush1.msra.mxu0 0.0
        %1804 = vmatprep.subr.mxu0 0.0
        %1805 = vmatpush1.msra.mxu0 0.0
        %1806 = vmatprep.subr.mxu0 0.0
        %1807 = vmatpush1.msra.mxu0 0.0
        %1808 = vmatprep.subr.mxu0 0.0
        %1809 = vmatpush1.msra.mxu0 0.0
        %1810 = vmatprep.subr.mxu0 0.0
        %1811 = vmatpush1.msra.mxu0 0.0
        %1812 = vmatprep.subr.mxu0 0.0
        %1813 = vmatpush1.msra.mxu0 0.0
        %1814 = vmatprep.mubr.f32.mxu0 0.0
        %1815 = vmatmul.mubr.f32.gmra.mrb[0].mxu0 %v1745
        %v1816 = vpop.f32.mrb[0].mxu0
        %v1817 = vadd.f32 %v1743, %v1816
        %v1818 = vpop.f32.mrb[0].mxu0
        %1819 = vmatprep.mubr.f32.mxu0 0.0
        %1820 = vmatmul.mubr.f32.gmra.mrb[0].mxu0 %v1748
        %v1821 = vpop.f32.mrb[0].mxu0
        %v1822 = vadd.f32 %v1743, %v1821
        %v1823 = vpop.f32.mrb[0].mxu0
        %1824 = vdwg.mxu0
        %v1825 = vadd.f32 %v272, %v1817
        %v1826 = vadd.f32 %v273, %v1822
        %v1827 = vsel %vm299, %v1825, 0.0
        %1828 = vadd.xlane.f32.xlu0 %v1827
        %v1829 = vpop.xlane.xlu0 %1828
        %v1830 = vsel %vm299, %v1826, 0.0
        %1831 = vadd.xlane.f32.xlu0 %v1830
        %v1832 = vpop.xlane.xlu0 %1831
        %v1833 = vrcp.pop 32.0
        %v1834 = vmul.f32 %v1829, %v1833
        %v1835 = vmul.f32 %v1832, %v1833
        %v1836 = vsub.f32 %v1825, %v1834
        %v1837 = vsub.f32 %v1826, %v1835
        %v1838 = vmul.f32 %v1836, %v1836
        %v1839 = vmul.f32 %v1837, %v1837
        %v1840 = vsel %vm299, %v1838, 0.0
        %1841 = vadd.xlane.f32.xlu0 %v1840
        %v1842 = vpop.xlane.xlu0 %1841
        %v1843 = vsel %vm299, %v1839, 0.0
        %1844 = vadd.xlane.f32.xlu0 %v1843
        %v1845 = vpop.xlane.xlu0 %1844
        %v1846 = vmul.f32 %v1842, %v1833
        %v1847 = vmul.f32 %v1845, %v1833
        %v1848 = vadd.f32 %v1846, 1e-05
        %v1849 = vadd.f32 %v1847, 1e-05
        %v1850 = vrsqrt.pop %v1848
        %v1851 = vrsqrt.pop %v1849
        %v1852 = vmul.f32 %v1836, %v1850
        %v1853 = vmul.f32 %v1837, %v1851
        %v1854 = vlaneseq
        %v1855 = vshrl.u32 %v1854, 7
        %v1856 = vsub.s32 2, %v1855
        %v1857 = vrot.slane %v294, %v1856
        %v1858 = vmul.f32 %v1852, %v1857
        %v1859 = vmul.f32 %v1853, %v1857
        %v1860 = vlaneseq
        %v1861 = vshrl.u32 %v1860, 7
        %v1862 = vsub.s32 3, %v1861
        %v1863 = vrot.slane %v294, %v1862
        %v1864 = vadd.f32 %v1858, %v1863
        %v1865 = vadd.f32 %v1859, %v1863
        %v1866 = vlaneseq
        %v1867 = vshrl.u32 %v1866, 7
        %v1868 = vsub.s32 4, %v1867
        %v1869 = vrot.slane %v294, %v1868
        %1878 = vrot.lane.b32.xlu0 %v274, 32
        %v1879 = vpop.permute.xlu0 %1878
        %1880 = vrot.lane.b32.xlu0 %v275, 32
        %v1881 = vpop.permute.xlu0 %1880
        %1882 = vrot.lane.b32.xlu0 %v276, 32
        %v1883 = vpop.permute.xlu0 %1882
        %1884 = vrot.lane.b32.xlu0 %v277, 32
        %v1885 = vpop.permute.xlu0 %1884
        %1886 = vrot.lane.b32.xlu0 %v278, 32
        %v1887 = vpop.permute.xlu0 %1886
        %1888 = vrot.lane.b32.xlu0 %v279, 32
        %v1889 = vpop.permute.xlu0 %1888
        %1890 = vrot.lane.b32.xlu0 %v280, 32
        %v1891 = vpop.permute.xlu0 %1890
        %1892 = vrot.lane.b32.xlu0 %v281, 32
        %v1893 = vpop.permute.xlu0 %1892
        %v1894 = vsel %vm299, %v1879, %v1881
        %v1895 = vsel %vm299, %v1883, %v1885
        %v1896 = vsel %vm299, %v1887, %v1889
        %v1897 = vsel %vm299, %v1891, %v1893
        %v1903 = vsel %vm299, %v1864, 0
        %v1906 = vsel %vm299, %v1865, 0
        %1908 = vmatprep.subr.mxu0 0.0
        %1909 = vmatpush1.msra.mxu0 %v1894
        %1910 = vmatprep.subr.mxu0 0.0
        %1911 = vmatpush1.msra.mxu0 %v1895
        %1912 = vmatprep.subr.mxu0 0.0
        %1913 = vmatpush1.msra.mxu0 %v1896
        %1914 = vmatprep.subr.mxu0 0.0
        %1915 = vmatpush1.msra.mxu0 %v1897
        %1916 = vmatprep.subr.mxu0 0.0
        %1917 = vmatpush1.msra.mxu0 0.0
        %1918 = vmatprep.subr.mxu0 0.0
        %1919 = vmatpush1.msra.mxu0 0.0
        %1920 = vmatprep.subr.mxu0 0.0
        %1921 = vmatpush1.msra.mxu0 0.0
        %1922 = vmatprep.subr.mxu0 0.0
        %1923 = vmatpush1.msra.mxu0 0.0
        %1924 = vmatprep.subr.mxu0 0.0
        %1925 = vmatpush1.msra.mxu0 0.0
        %1926 = vmatprep.subr.mxu0 0.0
        %1927 = vmatpush1.msra.mxu0 0.0
        %1928 = vmatprep.subr.mxu0 0.0
        %1929 = vmatpush1.msra.mxu0 0.0
        %1930 = vmatprep.subr.mxu0 0.0
        %1931 = vmatpush1.msra.mxu0 0.0
        %1932 = vmatprep.subr.mxu0 0.0
        %1933 = vmatpush1.msra.mxu0 0.0
        %1934 = vmatprep.subr.mxu0 0.0
        %1935 = vmatpush1.msra.mxu0 0.0
        %1936 = vmatprep.subr.mxu0 0.0
        %1937 = vmatpush1.msra.mxu0 0.0
        %1938 = vmatprep.subr.mxu0 0.0
        %1939 = vmatpush1.msra.mxu0 0.0
        %1940 = vmatprep.subr.mxu0 0.0
        %1941 = vmatpush1.msra.mxu0 0.0
        %1942 = vmatprep.subr.mxu0 0.0
        %1943 = vmatpush1.msra.mxu0 0.0
        %1944 = vmatprep.subr.mxu0 0.0
        %1945 = vmatpush1.msra.mxu0 0.0
        %1946 = vmatprep.subr.mxu0 0.0
        %1947 = vmatpush1.msra.mxu0 0.0
        %1948 = vmatprep.subr.mxu0 0.0
        %1949 = vmatpush1.msra.mxu0 0.0
        %1950 = vmatprep.subr.mxu0 0.0
        %1951 = vmatpush1.msra.mxu0 0.0
        %1952 = vmatprep.subr.mxu0 0.0
        %1953 = vmatpush1.msra.mxu0 0.0
        %1954 = vmatprep.subr.mxu0 0.0
        %1955 = vmatpush1.msra.mxu0 0.0
        %1956 = vmatprep.subr.mxu0 0.0
        %1957 = vmatpush1.msra.mxu0 0.0
        %1958 = vmatprep.subr.mxu0 0.0
        %1959 = vmatpush1.msra.mxu0 0.0
        %1960 = vmatprep.subr.mxu0 0.0
        %1961 = vmatpush1.msra.mxu0 0.0
        %1962 = vmatprep.subr.mxu0 0.0
        %1963 = vmatpush1.msra.mxu0 0.0
        %1964 = vmatprep.subr.mxu0 0.0
        %1965 = vmatpush1.msra.mxu0 0.0
        %1966 = vmatprep.subr.mxu0 0.0
        %1967 = vmatpush1.msra.mxu0 0.0
        %1968 = vmatprep.subr.mxu0 0.0
        %1969 = vmatpush1.msra.mxu0 0.0
        %1970 = vmatprep.subr.mxu0 0.0
        %1971 = vmatpush1.msra.mxu0 0.0
        %1972 = vmatprep.mubr.f32.mxu0 0.0
        %1973 = vmatmul.mubr.f32.gmra.mrb[0].mxu0 %v1903
        %v1974 = vpop.f32.mrb[0].mxu0
        %v1975 = vadd.f32 %v1869, %v1974
        %v1976 = vpop.f32.mrb[0].mxu0
        %1977 = vmatprep.mubr.f32.mxu0 0.0
        %1978 = vmatmul.mubr.f32.gmra.mrb[0].mxu0 %v1906
        %v1979 = vpop.f32.mrb[0].mxu0
        %v1980 = vadd.f32 %v1869, %v1979
        %v1981 = vpop.f32.mrb[0].mxu0
        %1982 = vdwg.mxu0
        %v1983 = vmax.f32 %v1975, 0.0
        %v1984 = vmax.f32 %v1980, 0.0
        %v1985 = vlaneseq
        %v1986 = vshrl.u32 %v1985, 7
        %v1987 = vsub.s32 5, %v1986
        %v1988 = vrot.slane %v294, %v1987
        %vm1989 = vcmask 523264
        %v1991 = vsel %vm1989, %v1983, 0
        %v1994 = vsel %vm1989, %v1984, 0
        %1996 = vmatprep.subr.mxu0 0.0
        %1997 = vmatpush1.msra.mxu0 %v286
        %1998 = vmatprep.subr.mxu0 0.0
        %1999 = vmatpush1.msra.mxu0 %v287
        %2000 = vmatprep.subr.mxu0 0.0
        %2001 = vmatpush1.msra.mxu0 %v288
        %2002 = vmatprep.subr.mxu0 0.0
        %2003 = vmatpush1.msra.mxu0 %v289
        %2004 = vmatprep.subr.mxu0 0.0
        %2005 = vmatpush1.msra.mxu0 %v290
        %2006 = vmatprep.subr.mxu0 0.0
        %2007 = vmatpush1.msra.mxu0 %v291
        %2008 = vmatprep.subr.mxu0 0.0
        %2009 = vmatpush1.msra.mxu0 %v292
        %2010 = vmatprep.subr.mxu0 0.0
        %2011 = vmatpush1.msra.mxu0 %v293
        %2012 = vmatprep.subr.mxu0 0.0
        %2013 = vmatpush1.msra.mxu0 0.0
        %2014 = vmatprep.subr.mxu0 0.0
        %2015 = vmatpush1.msra.mxu0 0.0
        %2016 = vmatprep.subr.mxu0 0.0
        %2017 = vmatpush1.msra.mxu0 0.0
        %2018 = vmatprep.subr.mxu0 0.0
        %2019 = vmatpush1.msra.mxu0 0.0
        %2020 = vmatprep.subr.mxu0 0.0
        %2021 = vmatpush1.msra.mxu0 0.0
        %2022 = vmatprep.subr.mxu0 0.0
        %2023 = vmatpush1.msra.mxu0 0.0
        %2024 = vmatprep.subr.mxu0 0.0
        %2025 = vmatpush1.msra.mxu0 0.0
        %2026 = vmatprep.subr.mxu0 0.0
        %2027 = vmatpush1.msra.mxu0 0.0
        %2028 = vmatprep.subr.mxu0 0.0
        %2029 = vmatpush1.msra.mxu0 0.0
        %2030 = vmatprep.subr.mxu0 0.0
        %2031 = vmatpush1.msra.mxu0 0.0
        %2032 = vmatprep.subr.mxu0 0.0
        %2033 = vmatpush1.msra.mxu0 0.0
        %2034 = vmatprep.subr.mxu0 0.0
        %2035 = vmatpush1.msra.mxu0 0.0
        %2036 = vmatprep.subr.mxu0 0.0
        %2037 = vmatpush1.msra.mxu0 0.0
        %2038 = vmatprep.subr.mxu0 0.0
        %2039 = vmatpush1.msra.mxu0 0.0
        %2040 = vmatprep.subr.mxu0 0.0
        %2041 = vmatpush1.msra.mxu0 0.0
        %2042 = vmatprep.subr.mxu0 0.0
        %2043 = vmatpush1.msra.mxu0 0.0
        %2044 = vmatprep.subr.mxu0 0.0
        %2045 = vmatpush1.msra.mxu0 0.0
        %2046 = vmatprep.subr.mxu0 0.0
        %2047 = vmatpush1.msra.mxu0 0.0
        %2048 = vmatprep.subr.mxu0 0.0
        %2049 = vmatpush1.msra.mxu0 0.0
        %2050 = vmatprep.subr.mxu0 0.0
        %2051 = vmatpush1.msra.mxu0 0.0
        %2052 = vmatprep.subr.mxu0 0.0
        %2053 = vmatpush1.msra.mxu0 0.0
        %2054 = vmatprep.subr.mxu0 0.0
        %2055 = vmatpush1.msra.mxu0 0.0
        %2056 = vmatprep.subr.mxu0 0.0
        %2057 = vmatpush1.msra.mxu0 0.0
        %2058 = vmatprep.subr.mxu0 0.0
        %2059 = vmatpush1.msra.mxu0 0.0
        %2060 = vmatprep.mubr.f32.mxu0 0.0
        %2061 = vmatmul.mubr.f32.gmra.mrb[0].mxu0 %v1991
        %v2062 = vpop.f32.mrb[0].mxu0
        %v2063 = vadd.f32 %v1988, %v2062
        %v2064 = vpop.f32.mrb[0].mxu0
        %2065 = vmatprep.mubr.f32.mxu0 0.0
        %2066 = vmatmul.mubr.f32.gmra.mrb[0].mxu0 %v1994
        %v2067 = vpop.f32.mrb[0].mxu0
        %v2068 = vadd.f32 %v1988, %v2067
        %v2069 = vpop.f32.mrb[0].mxu0
        %2070 = vdwg.mxu0
        %v2071 = vadd.f32 %v1864, %v2063
        %v2072 = vadd.f32 %v1865, %v2068
        %v2073 = vsel %vm299, %v2071, 0.0
        %2074 = vadd.xlane.f32.xlu0 %v2073
        %v2075 = vpop.xlane.xlu0 %2074
        %v2076 = vsel %vm299, %v2072, 0.0
        %2077 = vadd.xlane.f32.xlu0 %v2076
        %v2078 = vpop.xlane.xlu0 %2077
        %v2079 = vmul.f32 %v2075, %v1833
        %v2080 = vmul.f32 %v2078, %v1833
        %v2081 = vsub.f32 %v2071, %v2079
        %v2082 = vsub.f32 %v2072, %v2080
        %v2083 = vmul.f32 %v2081, %v2081
        %v2084 = vmul.f32 %v2082, %v2082
        %v2085 = vsel %vm299, %v2083, 0.0
        %2086 = vadd.xlane.f32.xlu0 %v2085
        %v2087 = vpop.xlane.xlu0 %2086
        %v2088 = vsel %vm299, %v2084, 0.0
        %2089 = vadd.xlane.f32.xlu0 %v2088
        %v2090 = vpop.xlane.xlu0 %2089
        %v2091 = vmul.f32 %v2087, %v1833
        %v2092 = vmul.f32 %v2090, %v1833
        %v2093 = vadd.f32 %v2091, 1e-05
        %v2094 = vadd.f32 %v2092, 1e-05
        %v2095 = vrsqrt.pop %v2093
        %v2096 = vrsqrt.pop %v2094
        %v2097 = vmul.f32 %v2081, %v2095
        %v2098 = vmul.f32 %v2082, %v2096
        %v2099 = vlaneseq
        %v2100 = vshrl.u32 %v2099, 7
        %v2101 = vsub.s32 6, %v2100
        %v2102 = vrot.slane %v294, %v2101
        %v2103 = vmul.f32 %v2097, %v2102
        %v2104 = vmul.f32 %v2098, %v2102
        %v2105 = vlaneseq
        %v2106 = vshrl.u32 %v2105, 7
        %v2107 = vsub.s32 7, %v2106
        %v2108 = vrot.slane %v294, %v2107
        %v2109 = vadd.f32 %v2103, %v2108
        %v2110 = vadd.f32 %v2104, %v2108
        %2111 = vst.msk [vmem:[#allocation5] sm:$0xff] %vm299, %v2109
        %2112 = vst.msk [vmem:[#allocation5 + $0x8] sm:$0xff] %vm299, %v2110
        // Predicated region
        $region45: #{transformer_encoder.1} parent=35 // pred_check
          %p2113 = pneg %p151
        $region46: #{transformer_encoder.1} parent=35 // pred_check_branch
          %2115 = sbr.rel (%p2113) target = $region48
        $region47: #{transformer_encoder.1} parent=35 // pred_region
          %s2116 = smul.u32 2, %s21
          %s2118 = ssub.s32 256, 256
          %2119 = vsyncadd [#allocation4], %s2118
          %s2120 = smul.addr %s2116, 128
          %s2121 = scalar_lea.hbm %s4, %s2120
          %s2122 = sshll.u32 [#allocation5], 4
          %s2123 = int_to_ptr.vmem [resolvable:$true] %s2122
          %2128 = dma.vmem_to_hbm [thread:$0]  %s2123, 256, %s2121, [#allocation4], 128, 128, 8
        $region48: #{transformer_encoder.1} parent=35 // pred_fallthru
          _
        // Predicated region
        $region49: #{transformer_encoder.1} parent=35 // pred_check
          %p2129 = pneg %p151
        $region50: #{transformer_encoder.1} parent=35 // pred_check_branch
          %2131 = sbr.rel (%p2129) target = $region52
        $region51: #{transformer_encoder.1} parent=35 // pred_region
          %2132 = dma.done [#allocation4], 256
        $region52: #{transformer_encoder.1} parent=35 // pred_fallthru
          _
      $region36: #{transformer_encoder.1} parent=5 // pred_fallthru
        _
      %p2133 = scmp.le.s32.totalorder 2, %s12
      // Predicated region
      $region53: #{transformer_encoder.1} parent=5 // pred_check
        %p2134 = pneg %p2133
      $region54: #{transformer_encoder.1} parent=5 // pred_check_branch
        %2136 = sbr.rel (%p2134) target = $region56
      $region55: #{transformer_encoder.1} parent=5 // pred_region
        %s2137 = ssub.s32 %s12, 2
      $region56: #{transformer_encoder.1} parent=5 // pred_fallthru
        _
    $region6: #{transformer_encoder.1} parent=1 // loop_footer
      %s16 = sadd.s32 1, %s12
    $region7: #{transformer_encoder.1} parent=1 // loop_footer_branch
      %11 = sbr.rel target = $region3
    $region8: #{transformer_encoder.1} parent=1 // loop_exit
      _
    %2138 = vsyncpa [#allocation3], 1
    %s2139 = scalar_lea.sflag [#allocation3], 1
    %2140 = vsyncpa %s2139, 1
    %2141 = vsyncpa [#allocation4], 1
    %s2142 = scalar_lea.sflag [#allocation4], 1
    %2143 = vsyncpa %s2142, 1

</llo_original>
